<compile_context>
chip_gen: v7x
topology: tpu7x:2x2x1
jax: 0.10.0
libtpu: 0.0.40
codegen_flags: <defaults>
</compile_context>

<pallas_src>
import math

import numpy as np

import jax
import jax.numpy as jnp
from jax import lax
from jax.experimental import pallas as pl
from jax.experimental.pallas import tpu as pltpu


def _make_ctc_boundary_kernel(R: int, J: int):
    """Kernel factory: R batch rows per grid step, J = static segment-axis cap."""

    def kernel(neff_ref,      # (B_pad,) int32  SMEM (scalar prefetch): min(K-1, text_len)
               alpha_ref,     # (R, T)   f32    lane-dense CIF weights
               rank_ref,      # (R, T)   int32  inclusive spike count (cumsum of spikes)
               rexc_ref,      # (R, T)   int32  exclusive spike count (rank - spike)
               out_ref):      # (R, 128) f32    packed output: lane 0 = per-row |seg-1| loss
        g = pl.program_id(0)

        # Segment ids j+1 = 1..J down the sublane axis; the frame axis stays on lanes.
        jcol = lax.broadcasted_iota(jnp.int32, (J, 1), 0) + 1        # (J, 1)
        sub_iota = lax.broadcasted_iota(jnp.int32, (R, 128), 0)
        lane_iota = lax.broadcasted_iota(jnp.int32, (R, 128), 1)

        acc = jnp.zeros((R, 128), jnp.float32)
        for r in range(R):                       # static unroll; each row reduces to a scalar
            alpha_row = alpha_ref[r:r + 1, :]    # (1, T) f32
            rank_row = rank_ref[r:r + 1, :]      # (1, T) i32
            rexc_row = rexc_ref[r:r + 1, :]      # (1, T) i32

            # Range-test membership: frame t belongs to segment j (0-based) iff
            # spike_{j+1} <= t <= spike_{j+2}
            #   <=>  rank[t] >= j+1  and  rank_excl[t] <= j+1.
            member = (rank_row >= jcol) & (rexc_row <= jcol)          # (J, T) bool
            contrib = jnp.where(member, alpha_row, 0.0)               # (J, T) f32
            seg = jnp.sum(contrib, axis=1, keepdims=True)             # (J, 1) segment sums

            n_eff = neff_ref[g * R + r]                               # int32 scalar (SMEM)
            keep = jcol <= n_eff                                      # (J, 1): real, in-text columns
            ploss = jnp.sum(jnp.where(keep, jnp.abs(seg - 1.0), 0.0),
                            keepdims=True)                            # (1, 1)

            acc = acc + jnp.where((sub_iota == r) & (lane_iota == 0), ploss, 0.0)

        out_ref[...] = acc                        # one unmasked lane-dense store per step

    return kernel


def ctc_boundary_loss_v3(alpha, ctc_log_probs, mask, text_length,
                         spike_threshold: float = 0.0, blank_id: int = 0,
                         max_segments=None, rows_per_step: int = 8):
    """alpha (B,T) f32, ctc_log_probs (B,T,V) f32, mask (B,T), text_length (B,).

    max_segments (optional static int) caps the segment axis; it must be
    >= max(text_length) (n_eff <= text_length so larger columns never
    contribute).  Default (None) uses T, which is always safe.
    """
    if spike_threshold >= 1.0:
        raise ValueError("spike_threshold must be < 1.0")
    B, T = alpha.shape
    thr = math.log(1.0 - spike_threshold)

    # ---- fused XLA prologue: blank slice, spike detection, int32 spike ranks,
    # ---- and the O(B) per-row scalars (K, torch pad_sequence row length, n_eff).
    blank_lp = ctc_log_probs[..., blank_id].astype(jnp.float32)      # (B, T)
    spikes = ((blank_lp < thr) & (mask != 0)).astype(jnp.int32)      # (B, T)
    rank = jnp.cumsum(spikes, axis=-1, dtype=jnp.int32)              # (B, T) inclusive
    rank_excl = rank - spikes                                        # (B, T) exclusive
    tlen = text_length.astype(jnp.int32).reshape(B)

    k_tot = rank[:, -1]                                              # (B,) total spikes K
    spike0 = spikes[:, 0]                                            # (B,) spike at frame 0?
    n_seg = jnp.maximum(k_tot - 1, 0)                                # (B,) real segment count
    # torch pad_sequence row length (replicates the reference's idx.sum()>0 quirk:
    # a single spike at index 0 is treated as "no spikes"):
    #   K >= 2 -> K-1 ; K == 1 -> spike0 ; K == 0 -> 1
    row_len = jnp.where(k_tot >= 2, k_tot - 1,
                        jnp.where(k_tot == 1, spike0, jnp.ones_like(k_tot)))
    n_eff = jnp.minimum(n_seg, tlen)                                 # (B,) in-kernel column mask

    # ---- row batching: pad B to a multiple of R (padded rows have n_eff = 0).
    R = max(8, ((int(rows_per_step) + 7) // 8) * 8)
    B_pad = ((B + R - 1) // R) * R
    pad = B_pad - B
    alpha_p = jnp.pad(alpha.astype(jnp.float32), ((0, pad), (0, 0)))
    rank_p = jnp.pad(rank, ((0, pad), (0, 0)))
    rexc_p = jnp.pad(rank_excl, ((0, pad), (0, 0)))
    neff_p = jnp.pad(n_eff, ((0, pad),))
    G = B_pad // R

    # ---- segment-axis cap, rounded up to a lane-dense multiple of 128.
    cap = T if max_segments is None else min(int(max_segments), T)
    J = ((max(cap, 1) + 127) // 128) * 128

    # ---- VMEM budget: double-buffered I/O tiles + headroom for (J, T) temporaries.
    io_bytes = 2 * (3 * R * T * 4 + R * 128 * 4)
    tmp_bytes = 8 * J * T * 4
    vmem_limit = int(min(max(2 * (io_bytes + tmp_bytes), 8 * 1024 * 1024),
                         48 * 1024 * 1024))

    kernel = _make_ctc_boundary_kernel(R, J)
    grid_spec = pltpu.PrefetchScalarGridSpec(
        num_scalar_prefetch=1,
        grid=(G,),
        in_specs=[
            pl.BlockSpec((R, T), lambda g, neff: (g, 0)),   # alpha
            pl.BlockSpec((R, T), lambda g, neff: (g, 0)),   # rank (inclusive)
            pl.BlockSpec((R, T), lambda g, neff: (g, 0)),   # rank_excl
        ],
        out_specs=pl.BlockSpec((R, 128), lambda g, neff: (g, 0)),
    )

    packed = pl.pallas_call(
        kernel,
        out_shape=jax.ShapeDtypeStruct((B_pad, 128), jnp.float32),
        grid_spec=grid_spec,
        compiler_params=pltpu.CompilerParams(
            dimension_semantics=("parallel",),
            vmem_limit_bytes=vmem_limit),
    )(neff_p, alpha_p, rank_p, rexc_p)

    ploss = packed[:B, 0]                                            # per-row |seg-1| loss

    # ---- epilogue: batch-global pad_sequence width + padded-column |0-1| terms.
    k_max = jnp.max(row_len)
    pad_cols = jnp.minimum(k_max, tlen) - n_eff                      # >= 0 by construction
    loss = (jnp.sum(ploss) + jnp.sum(pad_cols).astype(jnp.float32)) / B
    return loss


def _reference_loss(alpha, ctc_log_probs, mask, text_length,
                    spike_threshold, blank_id):
    """Direct numpy port of PyTorch CtcBoundaryLossV3.forward (for checking)."""
    B, T = alpha.shape
    thr = math.log(1.0 - spike_threshold)
    blank = ctc_log_probs[:, :, blank_id]
    spikes = (blank < thr).astype(np.float32) * mask
    rows = []
    for i in range(B):
        idx = np.nonzero(spikes[i])[0]
        if idx.sum() > 0:
            segs = [float(alpha[i, s:e + 1].sum())
                    for s, e in zip(idx[:-1], idx[1:])]
            rows.append(np.asarray(segs, np.float32))
        else:
            rows.append(np.asarray([0.0], np.float32))
    k_max = max(r.shape[0] for r in rows)
    boundary = np.zeros((B, k_max), np.float32)
    for i, r in enumerate(rows):
        boundary[i, :r.shape[0]] = r
    max_tlen = int(np.max(text_length))
    length = min(k_max, max_tlen)
    text_mask = (np.arange(max_tlen)[None, :] < text_length[:, None])[:, :length]
    boundary = boundary[:, :length]
    return float(np.sum(np.abs(boundary - 1.0) * text_mask) / B)


if __name__ == "__main__":
    key = jax.random.PRNGKey(0)
    B, T, V = 4, 16, 8
    spike_threshold = 0.85   # selective spikes (blank prob must drop below 0.15)
    blank_id = 0

    k1, k2 = jax.random.split(key)
    alpha = jax.random.uniform(k1, (B, T), jnp.float32, minval=0.1, maxval=1.0)
    logits = jax.random.normal(k2, (B, T, V), jnp.float32)
    # Row 2: exactly one spike, at frame 0 (exercises the reference's idx.sum()==0 quirk).
    # Row 3: no spikes at all (blank always dominant).
    blank_bias = jnp.zeros((B, T), jnp.float32)
    blank_bias = blank_bias.at[2, :].set(20.0).at[2, 0].set(-20.0)
    blank_bias = blank_bias.at[3, :].set(20.0)
    logits = logits.at[:, :, blank_id].add(blank_bias)
    ctc_log_probs = jax.nn.log_softmax(logits, axis=-1)              # (B, T, V)

    frame_len = jnp.array([16, 11, 16, 9], jnp.int32)                # acoustic frame mask
    mask = (jnp.arange(T)[None, :] < frame_len[:, None]).astype(jnp.float32)
    text_length = jnp.array([5, 3, 4, 2], jnp.int32)

    loss = ctc_boundary_loss_v3(alpha, ctc_log_probs, mask, text_length,
                                spike_threshold=spike_threshold,
                                blank_id=blank_id,
                                max_segments=int(jnp.max(text_length)))
    loss = jax.block_until_ready(loss)

    ref = _reference_loss(np.asarray(alpha), np.asarray(ctc_log_probs),
                          np.asarray(mask), np.asarray(text_length),
                          spike_threshold, blank_id)
    assert np.isfinite(float(loss))
    np.testing.assert_allclose(float(loss), ref, rtol=1e-4, atol=1e-4)
    print("KERNEL_OK")
</pallas_src>

<mosaic_0001>
module attributes {stable_mosaic.version = 11 : i64} {
  func.func @kernel(%arg0: i32, %arg1: memref<8xi32, #tpu.memory_space<smem>>, %arg2: memref<8x16xf32, #tpu.memory_space<vmem>>, %arg3: memref<8x16xi32, #tpu.memory_space<vmem>>, %arg4: memref<8x16xi32, #tpu.memory_space<vmem>>, %arg5: memref<8x128xf32, #tpu.memory_space<vmem>>) attributes {dimension_semantics = [#tpu.dimension_semantics<parallel>], iteration_bounds = array<i64: 1>, scalar_prefetch = 1 : i64, scratch_operands = 0 : i64, tpu.core_type = #tpu.core_type<tc>, window_params = [{transform_indices = @transform_0, window_bounds = array<i64: 8, 16>}, {transform_indices = @transform_1, window_bounds = array<i64: 8, 16>}, {transform_indices = @transform_2, window_bounds = array<i64: 8, 16>}, {transform_indices = @transform_3, window_bounds = array<i64: 8, 128>}]} {
    %0 = tpu.iota {dimensions = array<i32: 0>} : vector<128x1xi32>
    %c1_i32 = arith.constant 1 : i32
    %1 = vector.broadcast %c1_i32 : i32 to vector<128x1xi32>
    %2 = arith.addi %0, %1 : vector<128x1xi32>
    %3 = tpu.iota {dimensions = array<i32: 0>} : vector<8x128xi32>
    %4 = tpu.iota {dimensions = array<i32: 1>} : vector<8x128xi32>
    %cst = arith.constant 0.000000e+00 : f32
    %5 = vector.broadcast %cst : f32 to vector<8x128xf32>
    %c0 = arith.constant 0 : index
    %c0_0 = arith.constant 0 : index
    %6 = vector.load %arg2[%c0, %c0_0] : memref<8x16xf32, #tpu.memory_space<vmem>>, vector<1x16xf32>
    %c0_1 = arith.constant 0 : index
    %c0_2 = arith.constant 0 : index
    %7 = vector.load %arg3[%c0_1, %c0_2] : memref<8x16xi32, #tpu.memory_space<vmem>>, vector<1x16xi32>
    %c0_3 = arith.constant 0 : index
    %c0_4 = arith.constant 0 : index
    %8 = vector.load %arg4[%c0_3, %c0_4] : memref<8x16xi32, #tpu.memory_space<vmem>>, vector<1x16xi32>
    %9 = vector.broadcast %7 : vector<1x16xi32> to vector<128x16xi32>
    %10 = vector.broadcast %2 : vector<128x1xi32> to vector<128x16xi32>
    %11 = arith.cmpi sge, %9, %10 : vector<128x16xi32>
    %12 = vector.broadcast %8 : vector<1x16xi32> to vector<128x16xi32>
    %13 = vector.broadcast %2 : vector<128x1xi32> to vector<128x16xi32>
    %14 = arith.cmpi sle, %12, %13 : vector<128x16xi32>
    %15 = arith.andi %11, %14 : vector<128x16xi1>
    %cst_5 = arith.constant 0.000000e+00 : f32
    %16 = vector.shape_cast %6 : vector<1x16xf32> to vector<1x16xf32>
    %17 = vector.broadcast %16 : vector<1x16xf32> to vector<128x16xf32>
    %18 = vector.broadcast %cst_5 : f32 to vector<128x16xf32>
    %19 = arith.select %15, %17, %18 : vector<128x16xi1>, vector<128x16xf32>
    %cst_6 = arith.constant dense<0.000000e+00> : vector<128xf32>
    %20 = vector.multi_reduction <add>, %19, %cst_6 [1] : vector<128x16xf32> to vector<128xf32>
    %21 = vector.shape_cast %20 : vector<128xf32> to vector<128x1xf32>
    %c8_i32 = arith.constant 8 : i32
    %22 = arith.muli %arg0, %c8_i32 : i32
    %c0_i32 = arith.constant 0 : i32
    %23 = arith.addi %22, %c0_i32 : i32
    %24 = arith.index_cast %23 : i32 to index
    %25 = memref.load %arg1[%24] : memref<8xi32, #tpu.memory_space<smem>>
    %26 = vector.broadcast %25 : i32 to vector<128x1xi32>
    %27 = arith.cmpi sle, %2, %26 : vector<128x1xi32>
    %cst_7 = arith.constant 1.000000e+00 : f32
    %28 = vector.broadcast %cst_7 : f32 to vector<128x1xf32>
    %29 = arith.subf %21, %28 : vector<128x1xf32>
    %30 = math.absf %29 : vector<128x1xf32>
    %cst_8 = arith.constant 0.000000e+00 : f32
    %31 = vector.broadcast %cst_8 : f32 to vector<128x1xf32>
    %32 = arith.select %27, %30, %31 : vector<128x1xi1>, vector<128x1xf32>
    %33 = vector.shape_cast %32 : vector<128x1xf32> to vector<1x128x1xf32>
    %cst_9 = arith.constant dense<0.000000e+00> : vector<1xf32>
    %34 = vector.multi_reduction <add>, %33, %cst_9 [1, 2] : vector<1x128x1xf32> to vector<1xf32>
    %35 = vector.shape_cast %34 : vector<1xf32> to vector<1x1x1xf32>
    %36 = vector.extract %35[0, 0, 0] : f32 from vector<1x1x1xf32>
    %37 = vector.broadcast %36 : f32 to vector<1x1xf32>
    %c0_i32_10 = arith.constant 0 : i32
    %38 = vector.broadcast %c0_i32_10 : i32 to vector<8x128xi32>
    %39 = arith.cmpi eq, %3, %38 : vector<8x128xi32>
    %c0_i32_11 = arith.constant 0 : i32
    %40 = vector.broadcast %c0_i32_11 : i32 to vector<8x128xi32>
    %41 = arith.cmpi eq, %4, %40 : vector<8x128xi32>
    %42 = arith.andi %39, %41 : vector<8x128xi1>
    %cst_12 = arith.constant 0.000000e+00 : f32
    %43 = vector.shape_cast %37 : vector<1x1xf32> to vector<1x1xf32>
    %44 = vector.broadcast %43 : vector<1x1xf32> to vector<8x128xf32>
    %45 = vector.broadcast %cst_12 : f32 to vector<8x128xf32>
    %46 = arith.select %42, %44, %45 : vector<8x128xi1>, vector<8x128xf32>
    %47 = arith.addf %5, %46 : vector<8x128xf32>
    %c1 = arith.constant 1 : index
    %c0_13 = arith.constant 0 : index
    %48 = vector.load %arg2[%c1, %c0_13] : memref<8x16xf32, #tpu.memory_space<vmem>>, vector<1x16xf32>
    %c1_14 = arith.constant 1 : index
    %c0_15 = arith.constant 0 : index
    %49 = vector.load %arg3[%c1_14, %c0_15] : memref<8x16xi32, #tpu.memory_space<vmem>>, vector<1x16xi32>
    %c1_16 = arith.constant 1 : index
    %c0_17 = arith.constant 0 : index
    %50 = vector.load %arg4[%c1_16, %c0_17] : memref<8x16xi32, #tpu.memory_space<vmem>>, vector<1x16xi32>
    %51 = vector.broadcast %49 : vector<1x16xi32> to vector<128x16xi32>
    %52 = vector.broadcast %2 : vector<128x1xi32> to vector<128x16xi32>
    %53 = arith.cmpi sge, %51, %52 : vector<128x16xi32>
    %54 = vector.broadcast %50 : vector<1x16xi32> to vector<128x16xi32>
    %55 = vector.broadcast %2 : vector<128x1xi32> to vector<128x16xi32>
    %56 = arith.cmpi sle, %54, %55 : vector<128x16xi32>
    %57 = arith.andi %53, %56 : vector<128x16xi1>
    %cst_18 = arith.constant 0.000000e+00 : f32
    %58 = vector.shape_cast %48 : vector<1x16xf32> to vector<1x16xf32>
    %59 = vector.broadcast %58 : vector<1x16xf32> to vector<128x16xf32>
    %60 = vector.broadcast %cst_18 : f32 to vector<128x16xf32>
    %61 = arith.select %57, %59, %60 : vector<128x16xi1>, vector<128x16xf32>
    %cst_19 = arith.constant dense<0.000000e+00> : vector<128xf32>
    %62 = vector.multi_reduction <add>, %61, %cst_19 [1] : vector<128x16xf32> to vector<128xf32>
    %63 = vector.shape_cast %62 : vector<128xf32> to vector<128x1xf32>
    %c8_i32_20 = arith.constant 8 : i32
    %64 = arith.muli %arg0, %c8_i32_20 : i32
    %c1_i32_21 = arith.constant 1 : i32
    %65 = arith.addi %64, %c1_i32_21 : i32
    %66 = arith.index_cast %65 : i32 to index
    %67 = memref.load %arg1[%66] : memref<8xi32, #tpu.memory_space<smem>>
    %68 = vector.broadcast %67 : i32 to vector<128x1xi32>
    %69 = arith.cmpi sle, %2, %68 : vector<128x1xi32>
    %cst_22 = arith.constant 1.000000e+00 : f32
    %70 = vector.broadcast %cst_22 : f32 to vector<128x1xf32>
    %71 = arith.subf %63, %70 : vector<128x1xf32>
    %72 = math.absf %71 : vector<128x1xf32>
    %cst_23 = arith.constant 0.000000e+00 : f32
    %73 = vector.broadcast %cst_23 : f32 to vector<128x1xf32>
    %74 = arith.select %69, %72, %73 : vector<128x1xi1>, vector<128x1xf32>
    %75 = vector.shape_cast %74 : vector<128x1xf32> to vector<1x128x1xf32>
    %cst_24 = arith.constant dense<0.000000e+00> : vector<1xf32>
    %76 = vector.multi_reduction <add>, %75, %cst_24 [1, 2] : vector<1x128x1xf32> to vector<1xf32>
    %77 = vector.shape_cast %76 : vector<1xf32> to vector<1x1x1xf32>
    %78 = vector.extract %77[0, 0, 0] : f32 from vector<1x1x1xf32>
    %79 = vector.broadcast %78 : f32 to vector<1x1xf32>
    %c1_i32_25 = arith.constant 1 : i32
    %80 = vector.broadcast %c1_i32_25 : i32 to vector<8x128xi32>
    %81 = arith.cmpi eq, %3, %80 : vector<8x128xi32>
    %c0_i32_26 = arith.constant 0 : i32
    %82 = vector.broadcast %c0_i32_26 : i32 to vector<8x128xi32>
    %83 = arith.cmpi eq, %4, %82 : vector<8x128xi32>
    %84 = arith.andi %81, %83 : vector<8x128xi1>
    %cst_27 = arith.constant 0.000000e+00 : f32
    %85 = vector.shape_cast %79 : vector<1x1xf32> to vector<1x1xf32>
    %86 = vector.broadcast %85 : vector<1x1xf32> to vector<8x128xf32>
    %87 = vector.broadcast %cst_27 : f32 to vector<8x128xf32>
    %88 = arith.select %84, %86, %87 : vector<8x128xi1>, vector<8x128xf32>
    %89 = arith.addf %47, %88 : vector<8x128xf32>
    %c2 = arith.constant 2 : index
    %c0_28 = arith.constant 0 : index
    %90 = vector.load %arg2[%c2, %c0_28] : memref<8x16xf32, #tpu.memory_space<vmem>>, vector<1x16xf32>
    %c2_29 = arith.constant 2 : index
    %c0_30 = arith.constant 0 : index
    %91 = vector.load %arg3[%c2_29, %c0_30] : memref<8x16xi32, #tpu.memory_space<vmem>>, vector<1x16xi32>
    %c2_31 = arith.constant 2 : index
    %c0_32 = arith.constant 0 : index
    %92 = vector.load %arg4[%c2_31, %c0_32] : memref<8x16xi32, #tpu.memory_space<vmem>>, vector<1x16xi32>
    %93 = vector.broadcast %91 : vector<1x16xi32> to vector<128x16xi32>
    %94 = vector.broadcast %2 : vector<128x1xi32> to vector<128x16xi32>
    %95 = arith.cmpi sge, %93, %94 : vector<128x16xi32>
    %96 = vector.broadcast %92 : vector<1x16xi32> to vector<128x16xi32>
    %97 = vector.broadcast %2 : vector<128x1xi32> to vector<128x16xi32>
    %98 = arith.cmpi sle, %96, %97 : vector<128x16xi32>
    %99 = arith.andi %95, %98 : vector<128x16xi1>
    %cst_33 = arith.constant 0.000000e+00 : f32
    %100 = vector.shape_cast %90 : vector<1x16xf32> to vector<1x16xf32>
    %101 = vector.broadcast %100 : vector<1x16xf32> to vector<128x16xf32>
    %102 = vector.broadcast %cst_33 : f32 to vector<128x16xf32>
    %103 = arith.select %99, %101, %102 : vector<128x16xi1>, vector<128x16xf32>
    %cst_34 = arith.constant dense<0.000000e+00> : vector<128xf32>
    %104 = vector.multi_reduction <add>, %103, %cst_34 [1] : vector<128x16xf32> to vector<128xf32>
    %105 = vector.shape_cast %104 : vector<128xf32> to vector<128x1xf32>
    %c8_i32_35 = arith.constant 8 : i32
    %106 = arith.muli %arg0, %c8_i32_35 : i32
    %c2_i32 = arith.constant 2 : i32
    %107 = arith.addi %106, %c2_i32 : i32
    %108 = arith.index_cast %107 : i32 to index
    %109 = memref.load %arg1[%108] : memref<8xi32, #tpu.memory_space<smem>>
    %110 = vector.broadcast %109 : i32 to vector<128x1xi32>
    %111 = arith.cmpi sle, %2, %110 : vector<128x1xi32>
    %cst_36 = arith.constant 1.000000e+00 : f32
    %112 = vector.broadcast %cst_36 : f32 to vector<128x1xf32>
    %113 = arith.subf %105, %112 : vector<128x1xf32>
    %114 = math.absf %113 : vector<128x1xf32>
    %cst_37 = arith.constant 0.000000e+00 : f32
    %115 = vector.broadcast %cst_37 : f32 to vector<128x1xf32>
    %116 = arith.select %111, %114, %115 : vector<128x1xi1>, vector<128x1xf32>
    %117 = vector.shape_cast %116 : vector<128x1xf32> to vector<1x128x1xf32>
    %cst_38 = arith.constant dense<0.000000e+00> : vector<1xf32>
    %118 = vector.multi_reduction <add>, %117, %cst_38 [1, 2] : vector<1x128x1xf32> to vector<1xf32>
    %119 = vector.shape_cast %118 : vector<1xf32> to vector<1x1x1xf32>
    %120 = vector.extract %119[0, 0, 0] : f32 from vector<1x1x1xf32>
    %121 = vector.broadcast %120 : f32 to vector<1x1xf32>
    %c2_i32_39 = arith.constant 2 : i32
    %122 = vector.broadcast %c2_i32_39 : i32 to vector<8x128xi32>
    %123 = arith.cmpi eq, %3, %122 : vector<8x128xi32>
    %c0_i32_40 = arith.constant 0 : i32
    %124 = vector.broadcast %c0_i32_40 : i32 to vector<8x128xi32>
    %125 = arith.cmpi eq, %4, %124 : vector<8x128xi32>
    %126 = arith.andi %123, %125 : vector<8x128xi1>
    %cst_41 = arith.constant 0.000000e+00 : f32
    %127 = vector.shape_cast %121 : vector<1x1xf32> to vector<1x1xf32>
    %128 = vector.broadcast %127 : vector<1x1xf32> to vector<8x128xf32>
    %129 = vector.broadcast %cst_41 : f32 to vector<8x128xf32>
    %130 = arith.select %126, %128, %129 : vector<8x128xi1>, vector<8x128xf32>
    %131 = arith.addf %89, %130 : vector<8x128xf32>
    %c3 = arith.constant 3 : index
    %c0_42 = arith.constant 0 : index
    %132 = vector.load %arg2[%c3, %c0_42] : memref<8x16xf32, #tpu.memory_space<vmem>>, vector<1x16xf32>
    %c3_43 = arith.constant 3 : index
    %c0_44 = arith.constant 0 : index
    %133 = vector.load %arg3[%c3_43, %c0_44] : memref<8x16xi32, #tpu.memory_space<vmem>>, vector<1x16xi32>
    %c3_45 = arith.constant 3 : index
    %c0_46 = arith.constant 0 : index
    %134 = vector.load %arg4[%c3_45, %c0_46] : memref<8x16xi32, #tpu.memory_space<vmem>>, vector<1x16xi32>
    %135 = vector.broadcast %133 : vector<1x16xi32> to vector<128x16xi32>
    %136 = vector.broadcast %2 : vector<128x1xi32> to vector<128x16xi32>
    %137 = arith.cmpi sge, %135, %136 : vector<128x16xi32>
    %138 = vector.broadcast %134 : vector<1x16xi32> to vector<128x16xi32>
    %139 = vector.broadcast %2 : vector<128x1xi32> to vector<128x16xi32>
    %140 = arith.cmpi sle, %138, %139 : vector<128x16xi32>
    %141 = arith.andi %137, %140 : vector<128x16xi1>
    %cst_47 = arith.constant 0.000000e+00 : f32
    %142 = vector.shape_cast %132 : vector<1x16xf32> to vector<1x16xf32>
    %143 = vector.broadcast %142 : vector<1x16xf32> to vector<128x16xf32>
    %144 = vector.broadcast %cst_47 : f32 to vector<128x16xf32>
    %145 = arith.select %141, %143, %144 : vector<128x16xi1>, vector<128x16xf32>
    %cst_48 = arith.constant dense<0.000000e+00> : vector<128xf32>
    %146 = vector.multi_reduction <add>, %145, %cst_48 [1] : vector<128x16xf32> to vector<128xf32>
    %147 = vector.shape_cast %146 : vector<128xf32> to vector<128x1xf32>
    %c8_i32_49 = arith.constant 8 : i32
    %148 = arith.muli %arg0, %c8_i32_49 : i32
    %c3_i32 = arith.constant 3 : i32
    %149 = arith.addi %148, %c3_i32 : i32
    %150 = arith.index_cast %149 : i32 to index
    %151 = memref.load %arg1[%150] : memref<8xi32, #tpu.memory_space<smem>>
    %152 = vector.broadcast %151 : i32 to vector<128x1xi32>
    %153 = arith.cmpi sle, %2, %152 : vector<128x1xi32>
    %cst_50 = arith.constant 1.000000e+00 : f32
    %154 = vector.broadcast %cst_50 : f32 to vector<128x1xf32>
    %155 = arith.subf %147, %154 : vector<128x1xf32>
    %156 = math.absf %155 : vector<128x1xf32>
    %cst_51 = arith.constant 0.000000e+00 : f32
    %157 = vector.broadcast %cst_51 : f32 to vector<128x1xf32>
    %158 = arith.select %153, %156, %157 : vector<128x1xi1>, vector<128x1xf32>
    %159 = vector.shape_cast %158 : vector<128x1xf32> to vector<1x128x1xf32>
    %cst_52 = arith.constant dense<0.000000e+00> : vector<1xf32>
    %160 = vector.multi_reduction <add>, %159, %cst_52 [1, 2] : vector<1x128x1xf32> to vector<1xf32>
    %161 = vector.shape_cast %160 : vector<1xf32> to vector<1x1x1xf32>
    %162 = vector.extract %161[0, 0, 0] : f32 from vector<1x1x1xf32>
    %163 = vector.broadcast %162 : f32 to vector<1x1xf32>
    %c3_i32_53 = arith.constant 3 : i32
    %164 = vector.broadcast %c3_i32_53 : i32 to vector<8x128xi32>
    %165 = arith.cmpi eq, %3, %164 : vector<8x128xi32>
    %c0_i32_54 = arith.constant 0 : i32
    %166 = vector.broadcast %c0_i32_54 : i32 to vector<8x128xi32>
    %167 = arith.cmpi eq, %4, %166 : vector<8x128xi32>
    %168 = arith.andi %165, %167 : vector<8x128xi1>
    %cst_55 = arith.constant 0.000000e+00 : f32
    %169 = vector.shape_cast %163 : vector<1x1xf32> to vector<1x1xf32>
    %170 = vector.broadcast %169 : vector<1x1xf32> to vector<8x128xf32>
    %171 = vector.broadcast %cst_55 : f32 to vector<8x128xf32>
    %172 = arith.select %168, %170, %171 : vector<8x128xi1>, vector<8x128xf32>
    %173 = arith.addf %131, %172 : vector<8x128xf32>
    %c4 = arith.constant 4 : index
    %c0_56 = arith.constant 0 : index
    %174 = vector.load %arg2[%c4, %c0_56] : memref<8x16xf32, #tpu.memory_space<vmem>>, vector<1x16xf32>
    %c4_57 = arith.constant 4 : index
    %c0_58 = arith.constant 0 : index
    %175 = vector.load %arg3[%c4_57, %c0_58] : memref<8x16xi32, #tpu.memory_space<vmem>>, vector<1x16xi32>
    %c4_59 = arith.constant 4 : index
    %c0_60 = arith.constant 0 : index
    %176 = vector.load %arg4[%c4_59, %c0_60] : memref<8x16xi32, #tpu.memory_space<vmem>>, vector<1x16xi32>
    %177 = vector.broadcast %175 : vector<1x16xi32> to vector<128x16xi32>
    %178 = vector.broadcast %2 : vector<128x1xi32> to vector<128x16xi32>
    %179 = arith.cmpi sge, %177, %178 : vector<128x16xi32>
    %180 = vector.broadcast %176 : vector<1x16xi32> to vector<128x16xi32>
    %181 = vector.broadcast %2 : vector<128x1xi32> to vector<128x16xi32>
    %182 = arith.cmpi sle, %180, %181 : vector<128x16xi32>
    %183 = arith.andi %179, %182 : vector<128x16xi1>
    %cst_61 = arith.constant 0.000000e+00 : f32
    %184 = vector.shape_cast %174 : vector<1x16xf32> to vector<1x16xf32>
    %185 = vector.broadcast %184 : vector<1x16xf32> to vector<128x16xf32>
    %186 = vector.broadcast %cst_61 : f32 to vector<128x16xf32>
    %187 = arith.select %183, %185, %186 : vector<128x16xi1>, vector<128x16xf32>
    %cst_62 = arith.constant dense<0.000000e+00> : vector<128xf32>
    %188 = vector.multi_reduction <add>, %187, %cst_62 [1] : vector<128x16xf32> to vector<128xf32>
    %189 = vector.shape_cast %188 : vector<128xf32> to vector<128x1xf32>
    %c8_i32_63 = arith.constant 8 : i32
    %190 = arith.muli %arg0, %c8_i32_63 : i32
    %c4_i32 = arith.constant 4 : i32
    %191 = arith.addi %190, %c4_i32 : i32
    %192 = arith.index_cast %191 : i32 to index
    %193 = memref.load %arg1[%192] : memref<8xi32, #tpu.memory_space<smem>>
    %194 = vector.broadcast %193 : i32 to vector<128x1xi32>
    %195 = arith.cmpi sle, %2, %194 : vector<128x1xi32>
    %cst_64 = arith.constant 1.000000e+00 : f32
    %196 = vector.broadcast %cst_64 : f32 to vector<128x1xf32>
    %197 = arith.subf %189, %196 : vector<128x1xf32>
    %198 = math.absf %197 : vector<128x1xf32>
    %cst_65 = arith.constant 0.000000e+00 : f32
    %199 = vector.broadcast %cst_65 : f32 to vector<128x1xf32>
    %200 = arith.select %195, %198, %199 : vector<128x1xi1>, vector<128x1xf32>
    %201 = vector.shape_cast %200 : vector<128x1xf32> to vector<1x128x1xf32>
    %cst_66 = arith.constant dense<0.000000e+00> : vector<1xf32>
    %202 = vector.multi_reduction <add>, %201, %cst_66 [1, 2] : vector<1x128x1xf32> to vector<1xf32>
    %203 = vector.shape_cast %202 : vector<1xf32> to vector<1x1x1xf32>
    %204 = vector.extract %203[0, 0, 0] : f32 from vector<1x1x1xf32>
    %205 = vector.broadcast %204 : f32 to vector<1x1xf32>
    %c4_i32_67 = arith.constant 4 : i32
    %206 = vector.broadcast %c4_i32_67 : i32 to vector<8x128xi32>
    %207 = arith.cmpi eq, %3, %206 : vector<8x128xi32>
    %c0_i32_68 = arith.constant 0 : i32
    %208 = vector.broadcast %c0_i32_68 : i32 to vector<8x128xi32>
    %209 = arith.cmpi eq, %4, %208 : vector<8x128xi32>
    %210 = arith.andi %207, %209 : vector<8x128xi1>
    %cst_69 = arith.constant 0.000000e+00 : f32
    %211 = vector.shape_cast %205 : vector<1x1xf32> to vector<1x1xf32>
    %212 = vector.broadcast %211 : vector<1x1xf32> to vector<8x128xf32>
    %213 = vector.broadcast %cst_69 : f32 to vector<8x128xf32>
    %214 = arith.select %210, %212, %213 : vector<8x128xi1>, vector<8x128xf32>
    %215 = arith.addf %173, %214 : vector<8x128xf32>
    %c5 = arith.constant 5 : index
    %c0_70 = arith.constant 0 : index
    %216 = vector.load %arg2[%c5, %c0_70] : memref<8x16xf32, #tpu.memory_space<vmem>>, vector<1x16xf32>
    %c5_71 = arith.constant 5 : index
    %c0_72 = arith.constant 0 : index
    %217 = vector.load %arg3[%c5_71, %c0_72] : memref<8x16xi32, #tpu.memory_space<vmem>>, vector<1x16xi32>
    %c5_73 = arith.constant 5 : index
    %c0_74 = arith.constant 0 : index
    %218 = vector.load %arg4[%c5_73, %c0_74] : memref<8x16xi32, #tpu.memory_space<vmem>>, vector<1x16xi32>
    %219 = vector.broadcast %217 : vector<1x16xi32> to vector<128x16xi32>
    %220 = vector.broadcast %2 : vector<128x1xi32> to vector<128x16xi32>
    %221 = arith.cmpi sge, %219, %220 : vector<128x16xi32>
    %222 = vector.broadcast %218 : vector<1x16xi32> to vector<128x16xi32>
    %223 = vector.broadcast %2 : vector<128x1xi32> to vector<128x16xi32>
    %224 = arith.cmpi sle, %222, %223 : vector<128x16xi32>
    %225 = arith.andi %221, %224 : vector<128x16xi1>
    %cst_75 = arith.constant 0.000000e+00 : f32
    %226 = vector.shape_cast %216 : vector<1x16xf32> to vector<1x16xf32>
    %227 = vector.broadcast %226 : vector<1x16xf32> to vector<128x16xf32>
    %228 = vector.broadcast %cst_75 : f32 to vector<128x16xf32>
    %229 = arith.select %225, %227, %228 : vector<128x16xi1>, vector<128x16xf32>
    %cst_76 = arith.constant dense<0.000000e+00> : vector<128xf32>
    %230 = vector.multi_reduction <add>, %229, %cst_76 [1] : vector<128x16xf32> to vector<128xf32>
    %231 = vector.shape_cast %230 : vector<128xf32> to vector<128x1xf32>
    %c8_i32_77 = arith.constant 8 : i32
    %232 = arith.muli %arg0, %c8_i32_77 : i32
    %c5_i32 = arith.constant 5 : i32
    %233 = arith.addi %232, %c5_i32 : i32
    %234 = arith.index_cast %233 : i32 to index
    %235 = memref.load %arg1[%234] : memref<8xi32, #tpu.memory_space<smem>>
    %236 = vector.broadcast %235 : i32 to vector<128x1xi32>
    %237 = arith.cmpi sle, %2, %236 : vector<128x1xi32>
    %cst_78 = arith.constant 1.000000e+00 : f32
    %238 = vector.broadcast %cst_78 : f32 to vector<128x1xf32>
    %239 = arith.subf %231, %238 : vector<128x1xf32>
    %240 = math.absf %239 : vector<128x1xf32>
    %cst_79 = arith.constant 0.000000e+00 : f32
    %241 = vector.broadcast %cst_79 : f32 to vector<128x1xf32>
    %242 = arith.select %237, %240, %241 : vector<128x1xi1>, vector<128x1xf32>
    %243 = vector.shape_cast %242 : vector<128x1xf32> to vector<1x128x1xf32>
    %cst_80 = arith.constant dense<0.000000e+00> : vector<1xf32>
    %244 = vector.multi_reduction <add>, %243, %cst_80 [1, 2] : vector<1x128x1xf32> to vector<1xf32>
    %245 = vector.shape_cast %244 : vector<1xf32> to vector<1x1x1xf32>
    %246 = vector.extract %245[0, 0, 0] : f32 from vector<1x1x1xf32>
    %247 = vector.broadcast %246 : f32 to vector<1x1xf32>
    %c5_i32_81 = arith.constant 5 : i32
    %248 = vector.broadcast %c5_i32_81 : i32 to vector<8x128xi32>
    %249 = arith.cmpi eq, %3, %248 : vector<8x128xi32>
    %c0_i32_82 = arith.constant 0 : i32
    %250 = vector.broadcast %c0_i32_82 : i32 to vector<8x128xi32>
    %251 = arith.cmpi eq, %4, %250 : vector<8x128xi32>
    %252 = arith.andi %249, %251 : vector<8x128xi1>
    %cst_83 = arith.constant 0.000000e+00 : f32
    %253 = vector.shape_cast %247 : vector<1x1xf32> to vector<1x1xf32>
    %254 = vector.broadcast %253 : vector<1x1xf32> to vector<8x128xf32>
    %255 = vector.broadcast %cst_83 : f32 to vector<8x128xf32>
    %256 = arith.select %252, %254, %255 : vector<8x128xi1>, vector<8x128xf32>
    %257 = arith.addf %215, %256 : vector<8x128xf32>
    %c6 = arith.constant 6 : index
    %c0_84 = arith.constant 0 : index
    %258 = vector.load %arg2[%c6, %c0_84] : memref<8x16xf32, #tpu.memory_space<vmem>>, vector<1x16xf32>
    %c6_85 = arith.constant 6 : index
    %c0_86 = arith.constant 0 : index
    %259 = vector.load %arg3[%c6_85, %c0_86] : memref<8x16xi32, #tpu.memory_space<vmem>>, vector<1x16xi32>
    %c6_87 = arith.constant 6 : index
    %c0_88 = arith.constant 0 : index
    %260 = vector.load %arg4[%c6_87, %c0_88] : memref<8x16xi32, #tpu.memory_space<vmem>>, vector<1x16xi32>
    %261 = vector.broadcast %259 : vector<1x16xi32> to vector<128x16xi32>
    %262 = vector.broadcast %2 : vector<128x1xi32> to vector<128x16xi32>
    %263 = arith.cmpi sge, %261, %262 : vector<128x16xi32>
    %264 = vector.broadcast %260 : vector<1x16xi32> to vector<128x16xi32>
    %265 = vector.broadcast %2 : vector<128x1xi32> to vector<128x16xi32>
    %266 = arith.cmpi sle, %264, %265 : vector<128x16xi32>
    %267 = arith.andi %263, %266 : vector<128x16xi1>
    %cst_89 = arith.constant 0.000000e+00 : f32
    %268 = vector.shape_cast %258 : vector<1x16xf32> to vector<1x16xf32>
    %269 = vector.broadcast %268 : vector<1x16xf32> to vector<128x16xf32>
    %270 = vector.broadcast %cst_89 : f32 to vector<128x16xf32>
    %271 = arith.select %267, %269, %270 : vector<128x16xi1>, vector<128x16xf32>
    %cst_90 = arith.constant dense<0.000000e+00> : vector<128xf32>
    %272 = vector.multi_reduction <add>, %271, %cst_90 [1] : vector<128x16xf32> to vector<128xf32>
    %273 = vector.shape_cast %272 : vector<128xf32> to vector<128x1xf32>
    %c8_i32_91 = arith.constant 8 : i32
    %274 = arith.muli %arg0, %c8_i32_91 : i32
    %c6_i32 = arith.constant 6 : i32
    %275 = arith.addi %274, %c6_i32 : i32
    %276 = arith.index_cast %275 : i32 to index
    %277 = memref.load %arg1[%276] : memref<8xi32, #tpu.memory_space<smem>>
    %278 = vector.broadcast %277 : i32 to vector<128x1xi32>
    %279 = arith.cmpi sle, %2, %278 : vector<128x1xi32>
    %cst_92 = arith.constant 1.000000e+00 : f32
    %280 = vector.broadcast %cst_92 : f32 to vector<128x1xf32>
    %281 = arith.subf %273, %280 : vector<128x1xf32>
    %282 = math.absf %281 : vector<128x1xf32>
    %cst_93 = arith.constant 0.000000e+00 : f32
    %283 = vector.broadcast %cst_93 : f32 to vector<128x1xf32>
    %284 = arith.select %279, %282, %283 : vector<128x1xi1>, vector<128x1xf32>
    %285 = vector.shape_cast %284 : vector<128x1xf32> to vector<1x128x1xf32>
    %cst_94 = arith.constant dense<0.000000e+00> : vector<1xf32>
    %286 = vector.multi_reduction <add>, %285, %cst_94 [1, 2] : vector<1x128x1xf32> to vector<1xf32>
    %287 = vector.shape_cast %286 : vector<1xf32> to vector<1x1x1xf32>
    %288 = vector.extract %287[0, 0, 0] : f32 from vector<1x1x1xf32>
    %289 = vector.broadcast %288 : f32 to vector<1x1xf32>
    %c6_i32_95 = arith.constant 6 : i32
    %290 = vector.broadcast %c6_i32_95 : i32 to vector<8x128xi32>
    %291 = arith.cmpi eq, %3, %290 : vector<8x128xi32>
    %c0_i32_96 = arith.constant 0 : i32
    %292 = vector.broadcast %c0_i32_96 : i32 to vector<8x128xi32>
    %293 = arith.cmpi eq, %4, %292 : vector<8x128xi32>
    %294 = arith.andi %291, %293 : vector<8x128xi1>
    %cst_97 = arith.constant 0.000000e+00 : f32
    %295 = vector.shape_cast %289 : vector<1x1xf32> to vector<1x1xf32>
    %296 = vector.broadcast %295 : vector<1x1xf32> to vector<8x128xf32>
    %297 = vector.broadcast %cst_97 : f32 to vector<8x128xf32>
    %298 = arith.select %294, %296, %297 : vector<8x128xi1>, vector<8x128xf32>
    %299 = arith.addf %257, %298 : vector<8x128xf32>
    %c7 = arith.constant 7 : index
    %c0_98 = arith.constant 0 : index
    %300 = vector.load %arg2[%c7, %c0_98] : memref<8x16xf32, #tpu.memory_space<vmem>>, vector<1x16xf32>
    %c7_99 = arith.constant 7 : index
    %c0_100 = arith.constant 0 : index
    %301 = vector.load %arg3[%c7_99, %c0_100] : memref<8x16xi32, #tpu.memory_space<vmem>>, vector<1x16xi32>
    %c7_101 = arith.constant 7 : index
    %c0_102 = arith.constant 0 : index
    %302 = vector.load %arg4[%c7_101, %c0_102] : memref<8x16xi32, #tpu.memory_space<vmem>>, vector<1x16xi32>
    %303 = vector.broadcast %301 : vector<1x16xi32> to vector<128x16xi32>
    %304 = vector.broadcast %2 : vector<128x1xi32> to vector<128x16xi32>
    %305 = arith.cmpi sge, %303, %304 : vector<128x16xi32>
    %306 = vector.broadcast %302 : vector<1x16xi32> to vector<128x16xi32>
    %307 = vector.broadcast %2 : vector<128x1xi32> to vector<128x16xi32>
    %308 = arith.cmpi sle, %306, %307 : vector<128x16xi32>
    %309 = arith.andi %305, %308 : vector<128x16xi1>
    %cst_103 = arith.constant 0.000000e+00 : f32
    %310 = vector.shape_cast %300 : vector<1x16xf32> to vector<1x16xf32>
    %311 = vector.broadcast %310 : vector<1x16xf32> to vector<128x16xf32>
    %312 = vector.broadcast %cst_103 : f32 to vector<128x16xf32>
    %313 = arith.select %309, %311, %312 : vector<128x16xi1>, vector<128x16xf32>
    %cst_104 = arith.constant dense<0.000000e+00> : vector<128xf32>
    %314 = vector.multi_reduction <add>, %313, %cst_104 [1] : vector<128x16xf32> to vector<128xf32>
    %315 = vector.shape_cast %314 : vector<128xf32> to vector<128x1xf32>
    %c8_i32_105 = arith.constant 8 : i32
    %316 = arith.muli %arg0, %c8_i32_105 : i32
    %c7_i32 = arith.constant 7 : i32
    %317 = arith.addi %316, %c7_i32 : i32
    %318 = arith.index_cast %317 : i32 to index
    %319 = memref.load %arg1[%318] : memref<8xi32, #tpu.memory_space<smem>>
    %320 = vector.broadcast %319 : i32 to vector<128x1xi32>
    %321 = arith.cmpi sle, %2, %320 : vector<128x1xi32>
    %cst_106 = arith.constant 1.000000e+00 : f32
    %322 = vector.broadcast %cst_106 : f32 to vector<128x1xf32>
    %323 = arith.subf %315, %322 : vector<128x1xf32>
    %324 = math.absf %323 : vector<128x1xf32>
    %cst_107 = arith.constant 0.000000e+00 : f32
    %325 = vector.broadcast %cst_107 : f32 to vector<128x1xf32>
    %326 = arith.select %321, %324, %325 : vector<128x1xi1>, vector<128x1xf32>
    %327 = vector.shape_cast %326 : vector<128x1xf32> to vector<1x128x1xf32>
    %cst_108 = arith.constant dense<0.000000e+00> : vector<1xf32>
    %328 = vector.multi_reduction <add>, %327, %cst_108 [1, 2] : vector<1x128x1xf32> to vector<1xf32>
    %329 = vector.shape_cast %328 : vector<1xf32> to vector<1x1x1xf32>
    %330 = vector.extract %329[0, 0, 0] : f32 from vector<1x1x1xf32>
    %331 = vector.broadcast %330 : f32 to vector<1x1xf32>
    %c7_i32_109 = arith.constant 7 : i32
    %332 = vector.broadcast %c7_i32_109 : i32 to vector<8x128xi32>
    %333 = arith.cmpi eq, %3, %332 : vector<8x128xi32>
    %c0_i32_110 = arith.constant 0 : i32
    %334 = vector.broadcast %c0_i32_110 : i32 to vector<8x128xi32>
    %335 = arith.cmpi eq, %4, %334 : vector<8x128xi32>
    %336 = arith.andi %333, %335 : vector<8x128xi1>
    %cst_111 = arith.constant 0.000000e+00 : f32
    %337 = vector.shape_cast %331 : vector<1x1xf32> to vector<1x1xf32>
    %338 = vector.broadcast %337 : vector<1x1xf32> to vector<8x128xf32>
    %339 = vector.broadcast %cst_111 : f32 to vector<8x128xf32>
    %340 = arith.select %336, %338, %339 : vector<8x128xi1>, vector<8x128xf32>
    %341 = arith.addf %299, %340 : vector<8x128xf32>
    %c0_112 = arith.constant 0 : index
    %c0_113 = arith.constant 0 : index
    %342 = vector.load %arg5[%c0_112, %c0_113] : memref<8x128xf32, #tpu.memory_space<vmem>>, vector<8x128xf32>
    tpu.vector_store %arg5[%c0_112, %c0_113], %341 {strides = array<i32>} : memref<8x128xf32, #tpu.memory_space<vmem>>, vector<8x128xf32>,
    return
  }
  func.func @transform_0(%arg0: i32, %arg1: memref<8xi32, #tpu.memory_space<smem>>) -> (i32, i32) {
    %c0_i32 = arith.constant 0 : i32
    %c0_i32_0 = arith.constant 0 : i32
    return %arg0, %c0_i32 : i32, i32
  }
  func.func @transform_1(%arg0: i32, %arg1: memref<8xi32, #tpu.memory_space<smem>>) -> (i32, i32) {
    %c0_i32 = arith.constant 0 : i32
    %c0_i32_0 = arith.constant 0 : i32
    return %arg0, %c0_i32 : i32, i32
  }
  func.func @transform_2(%arg0: i32, %arg1: memref<8xi32, #tpu.memory_space<smem>>) -> (i32, i32) {
    %c0_i32 = arith.constant 0 : i32
    %c0_i32_0 = arith.constant 0 : i32
    return %arg0, %c0_i32 : i32, i32
  }
  func.func @transform_3(%arg0: i32, %arg1: memref<8xi32, #tpu.memory_space<smem>>) -> (i32, i32) {
    %c0_i32 = arith.constant 0 : i32
    %c0_i32_0 = arith.constant 0 : i32
    return %arg0, %c0_i32 : i32, i32
  }
}

</mosaic_0001>

<llo_original>
// kernel: tpu_custom_call.1
$region0: #{tpu_custom_call.1}
  #allocation0 [shape = 'u32[]', space=smem, size = 0x4, offset = 0x4, fixed_abs, tag = 'smem constant byte address 0x4 - core index']
  #allocation1 [shape = 'u32[144,128]{1,0:T(1,128)}', space=vmem, size = 0x12000, scoped, tag = 'internal scratch']
  #allocation2 [shape = 's32[1]{0}', space=sflag, size = 0x4, scoped, tag = 'scoped memory for tpu_custom_call.1']
  #allocation3 [shape = 'u8[512]{0}', space=smem, size = 0x200, scoped, tag = 'prefetched SMEM operand 0']
  %s0 = inlined_call_operand.hbm [shape: s32[8], index: 0, kind: input, shape index: {}]
  %s1 = inlined_call_operand.hbm [shape: f32[8,16], index: 1, kind: input, shape index: {}]
  %s2 = inlined_call_operand.hbm [shape: s32[8,16], index: 2, kind: input, shape index: {}]
  %s3 = inlined_call_operand.vmem [shape: s32[8,16], index: 3, kind: input, shape index: {}]
  %s4 = inlined_call_operand.hbm [shape: f32[8,128], index: 4, kind: output, shape index: {}]
  %s5 = sld [smem:[#allocation0]]
  $region30: #{tpu_custom_call.1} parent=0
    _
  %s7 = ssub.s32 1, %s5
  %s8 = scalar_select 0, %s7, %s5
  %10 = dma.hbm_to_smem %s0, 16, [#allocation3], [#allocation2]
  %11 = dma.done [#allocation2], 16
  %12 = sfence
  $region1: #{tpu_custom_call.1} parent=0
    #allocation4 [shape = 'u8[4096]{0}', space=vmem, size = 0x1000, scoped, tag = 'input window, operand 1, single buffered']
    #allocation5 [shape = 's32[1]{0}', space=sflag, size = 0x4, scoped, tag = 'scoped memory for tpu_custom_call.1']
    #allocation6 [shape = 's32[1]{0}', space=sflag, size = 0x4, scoped, tag = 'scoped memory for tpu_custom_call.1']
    #allocation7 [shape = 'u8[4096]{0}', space=vmem, size = 0x1000, scoped, tag = 'input window, operand 2, single buffered']
    #allocation8 [shape = 's32[1]{0}', space=sflag, size = 0x4, scoped, tag = 'scoped memory for tpu_custom_call.1']
    #allocation9 [shape = 'u8[4096]{0}', space=vmem, size = 0x1000, scoped, tag = 'output window, operand 0, single buffered']
    %13 = vsyncpa [#allocation5], 0
    %14 = vsyncpa [#allocation8], 0
    %15 = vsyncpa [#allocation6], 0
    // Predicated region
    $region2: #{tpu_custom_call.1} parent=1 // pred_check
      _
    $region3: #{tpu_custom_call.1} parent=1 // pred_check_branch
      %17 = sbr.rel (0) target = $region5
    $region4: #{tpu_custom_call.1} parent=1 // pred_region
      %s19 = ssub.s32 128, 128
      %20 = vsyncadd [#allocation5], %s19
      %s22 = sshll.u32 [#allocation4], 4
      %s23 = int_to_ptr.vmem [resolvable:$true] %s22
      %25 = dma.hbm_to_vmem [thread:$0]  %s1, 128, %s23, [#allocation5]
    $region5: #{tpu_custom_call.1} parent=1 // pred_fallthru
      _
    // Predicated region
    $region6: #{tpu_custom_call.1} parent=1 // pred_check
      _
    $region7: #{tpu_custom_call.1} parent=1 // pred_check_branch
      %27 = sbr.rel (0) target = $region9
    $region8: #{tpu_custom_call.1} parent=1 // pred_region
      %s29 = ssub.s32 128, 128
      %30 = vsyncadd [#allocation8], %s29
      %s32 = sshll.u32 [#allocation7], 4
      %s33 = int_to_ptr.vmem [resolvable:$true] %s32
      %35 = dma.hbm_to_vmem [thread:$0]  %s2, 128, %s33, [#allocation8]
    $region9: #{tpu_custom_call.1} parent=1 // pred_fallthru
      _
    // Predicated region
    $region10: #{tpu_custom_call.1} parent=1 // pred_check
      _
    $region11: #{tpu_custom_call.1} parent=1 // pred_check_branch
      %37 = sbr.rel (0) target = $region13
    $region12: #{tpu_custom_call.1} parent=1 // pred_region
      _
    $region13: #{tpu_custom_call.1} parent=1 // pred_fallthru
      _
    // Predicated region
    $region14: #{tpu_custom_call.1} parent=1 // pred_check
      _
    $region15: #{tpu_custom_call.1} parent=1 // pred_check_branch
      %39 = sbr.rel (0) target = $region17
    $region16: #{tpu_custom_call.1} parent=1 // pred_region
      %40 = dma.done [#allocation5], 128
    $region17: #{tpu_custom_call.1} parent=1 // pred_fallthru
      _
    // Predicated region
    $region18: #{tpu_custom_call.1} parent=1 // pred_check
      _
    $region19: #{tpu_custom_call.1} parent=1 // pred_check_branch
      %42 = sbr.rel (0) target = $region21
    $region20: #{tpu_custom_call.1} parent=1 // pred_region
      %43 = dma.done [#allocation8], 128
    $region21: #{tpu_custom_call.1} parent=1 // pred_fallthru
      _
    %v44 = vlaneseq
    %v45 = vshrl.u32 %v44, 7
    %v46 = vadd.s32 %v45, 8
    %v47 = vadd.s32 %v45, 16
    %v48 = vadd.s32 %v45, 24
    %v49 = vadd.s32 %v45, 32
    %v50 = vadd.s32 %v45, 40
    %v51 = vadd.s32 %v45, 48
    %v52 = vadd.s32 %v45, 56
    %v53 = vadd.s32 %v45, 64
    %v54 = vadd.s32 %v45, 72
    %v55 = vadd.s32 %v45, 80
    %v56 = vadd.s32 %v45, 88
    %v57 = vadd.s32 %v45, 96
    %v58 = vadd.s32 %v45, 104
    %v59 = vadd.s32 %v45, 112
    %v60 = vadd.s32 %v45, 120
    %v61 = vadd.s32 %v45, 1
    %v62 = vadd.s32 %v46, 1
    %v63 = vadd.s32 %v47, 1
    %v64 = vadd.s32 %v48, 1
    %v65 = vadd.s32 %v49, 1
    %v66 = vadd.s32 %v50, 1
    %v67 = vadd.s32 %v51, 1
    %v68 = vadd.s32 %v52, 1
    %v69 = vadd.s32 %v53, 1
    %v70 = vadd.s32 %v54, 1
    %v71 = vadd.s32 %v55, 1
    %v72 = vadd.s32 %v56, 1
    %v73 = vadd.s32 %v57, 1
    %v74 = vadd.s32 %v58, 1
    %v75 = vadd.s32 %v59, 1
    %v76 = vadd.s32 %v60, 1
    %v77 = vlaneseq
    %v78 = vand.u32 %v77, 127
    %v79 = vld [vmem:[#allocation4] sm:$0x1]
    %v80 = vld [vmem:[#allocation7] sm:$0x1]
    %v81 = vld [vmem:[%s3] sm:$0x1]
    %v82 = vlaneseq
    %v83 = vshrl.u32 %v82, 7
    %v84 = vsub.s32 0, %v83
    %v85 = vrot.slane %v80, %v84
    %vm86 = vcmp.ge.s32.totalorder %v85, %v61
    %vm87 = vcmp.ge.s32.totalorder %v85, %v62
    %vm88 = vcmp.ge.s32.totalorder %v85, %v63
    %vm89 = vcmp.ge.s32.totalorder %v85, %v64
    %vm90 = vcmp.ge.s32.totalorder %v85, %v65
    %vm91 = vcmp.ge.s32.totalorder %v85, %v66
    %vm92 = vcmp.ge.s32.totalorder %v85, %v67
    %vm93 = vcmp.ge.s32.totalorder %v85, %v68
    %vm94 = vcmp.ge.s32.totalorder %v85, %v69
    %vm95 = vcmp.ge.s32.totalorder %v85, %v70
    %vm96 = vcmp.ge.s32.totalorder %v85, %v71
    %vm97 = vcmp.ge.s32.totalorder %v85, %v72
    %vm98 = vcmp.ge.s32.totalorder %v85, %v73
    %vm99 = vcmp.ge.s32.totalorder %v85, %v74
    %vm100 = vcmp.ge.s32.totalorder %v85, %v75
    %vm101 = vcmp.ge.s32.totalorder %v85, %v76
    %v102 = vlaneseq
    %v103 = vshrl.u32 %v102, 7
    %v104 = vsub.s32 0, %v103
    %v105 = vrot.slane %v81, %v104
    %vm106 = vcmp.le.s32.totalorder %v105, %v61
    %vm107 = vcmp.le.s32.totalorder %v105, %v62
    %vm108 = vcmp.le.s32.totalorder %v105, %v63
    %vm109 = vcmp.le.s32.totalorder %v105, %v64
    %vm110 = vcmp.le.s32.totalorder %v105, %v65
    %vm111 = vcmp.le.s32.totalorder %v105, %v66
    %vm112 = vcmp.le.s32.totalorder %v105, %v67
    %vm113 = vcmp.le.s32.totalorder %v105, %v68
    %vm114 = vcmp.le.s32.totalorder %v105, %v69
    %vm115 = vcmp.le.s32.totalorder %v105, %v70
    %vm116 = vcmp.le.s32.totalorder %v105, %v71
    %vm117 = vcmp.le.s32.totalorder %v105, %v72
    %vm118 = vcmp.le.s32.totalorder %v105, %v73
    %vm119 = vcmp.le.s32.totalorder %v105, %v74
    %vm120 = vcmp.le.s32.totalorder %v105, %v75
    %vm121 = vcmp.le.s32.totalorder %v105, %v76
    %vm122 = vmand %vm86, %vm106
    %vm123 = vmand %vm87, %vm107
    %vm124 = vmand %vm88, %vm108
    %vm125 = vmand %vm89, %vm109
    %vm126 = vmand %vm90, %vm110
    %vm127 = vmand %vm91, %vm111
    %vm128 = vmand %vm92, %vm112
    %vm129 = vmand %vm93, %vm113
    %vm130 = vmand %vm94, %vm114
    %vm131 = vmand %vm95, %vm115
    %vm132 = vmand %vm96, %vm116
    %vm133 = vmand %vm97, %vm117
    %vm134 = vmand %vm98, %vm118
    %vm135 = vmand %vm99, %vm119
    %vm136 = vmand %vm100, %vm120
    %vm137 = vmand %vm101, %vm121
    %v138 = vlaneseq
    %v139 = vshrl.u32 %v138, 7
    %v140 = vsub.s32 0, %v139
    %v141 = vrot.slane %v79, %v140
    %v142 = vsel %vm122, %v141, 0.0
    %v143 = vsel %vm123, %v141, 0.0
    %v144 = vsel %vm124, %v141, 0.0
    %v145 = vsel %vm125, %v141, 0.0
    %v146 = vsel %vm126, %v141, 0.0
    %v147 = vsel %vm127, %v141, 0.0
    %v148 = vsel %vm128, %v141, 0.0
    %v149 = vsel %vm129, %v141, 0.0
    %v150 = vsel %vm130, %v141, 0.0
    %v151 = vsel %vm131, %v141, 0.0
    %v152 = vsel %vm132, %v141, 0.0
    %v153 = vsel %vm133, %v141, 0.0
    %v154 = vsel %vm134, %v141, 0.0
    %v155 = vsel %vm135, %v141, 0.0
    %v156 = vsel %vm136, %v141, 0.0
    %v157 = vsel %vm137, %v141, 0.0
    %vm158 = vcmask 130048
    %v159 = vsel %vm158, %v142, 0.0
    %160 = vadd.xlane.f32.xlu0 %v159
    %v161 = vpop.xlane.xlu0 %160
    %v162 = vsel %vm158, %v143, 0.0
    %163 = vadd.xlane.f32.xlu0 %v162
    %v164 = vpop.xlane.xlu0 %163
    %v165 = vsel %vm158, %v144, 0.0
    %166 = vadd.xlane.f32.xlu0 %v165
    %v167 = vpop.xlane.xlu0 %166
    %v168 = vsel %vm158, %v145, 0.0
    %169 = vadd.xlane.f32.xlu0 %v168
    %v170 = vpop.xlane.xlu0 %169
    %v171 = vsel %vm158, %v146, 0.0
    %172 = vadd.xlane.f32.xlu0 %v171
    %v173 = vpop.xlane.xlu0 %172
    %v174 = vsel %vm158, %v147, 0.0
    %175 = vadd.xlane.f32.xlu0 %v174
    %v176 = vpop.xlane.xlu0 %175
    %v177 = vsel %vm158, %v148, 0.0
    %178 = vadd.xlane.f32.xlu0 %v177
    %v179 = vpop.xlane.xlu0 %178
    %v180 = vsel %vm158, %v149, 0.0
    %181 = vadd.xlane.f32.xlu0 %v180
    %v182 = vpop.xlane.xlu0 %181
    %v183 = vsel %vm158, %v150, 0.0
    %184 = vadd.xlane.f32.xlu0 %v183
    %v185 = vpop.xlane.xlu0 %184
    %v186 = vsel %vm158, %v151, 0.0
    %187 = vadd.xlane.f32.xlu0 %v186
    %v188 = vpop.xlane.xlu0 %187
    %v189 = vsel %vm158, %v152, 0.0
    %190 = vadd.xlane.f32.xlu0 %v189
    %v191 = vpop.xlane.xlu0 %190
    %v192 = vsel %vm158, %v153, 0.0
    %193 = vadd.xlane.f32.xlu0 %v192
    %v194 = vpop.xlane.xlu0 %193
    %v195 = vsel %vm158, %v154, 0.0
    %196 = vadd.xlane.f32.xlu0 %v195
    %v197 = vpop.xlane.xlu0 %196
    %v198 = vsel %vm158, %v155, 0.0
    %199 = vadd.xlane.f32.xlu0 %v198
    %v200 = vpop.xlane.xlu0 %199
    %v201 = vsel %vm158, %v156, 0.0
    %202 = vadd.xlane.f32.xlu0 %v201
    %v203 = vpop.xlane.xlu0 %202
    %v204 = vsel %vm158, %v157, 0.0
    %205 = vadd.xlane.f32.xlu0 %v204
    %v206 = vpop.xlane.xlu0 %205
    %s207 = smul.u32 0, 8
    %s208 = sld [smem:[#allocation3 + %s207]]
    %v209 = vstv %s208
    %vm210 = vcmp.le.s32.totalorder %v61, %v209
    %vm211 = vcmp.le.s32.totalorder %v62, %v209
    %vm212 = vcmp.le.s32.totalorder %v63, %v209
    %vm213 = vcmp.le.s32.totalorder %v64, %v209
    %vm214 = vcmp.le.s32.totalorder %v65, %v209
    %vm215 = vcmp.le.s32.totalorder %v66, %v209
    %vm216 = vcmp.le.s32.totalorder %v67, %v209
    %vm217 = vcmp.le.s32.totalorder %v68, %v209
    %vm218 = vcmp.le.s32.totalorder %v69, %v209
    %vm219 = vcmp.le.s32.totalorder %v70, %v209
    %vm220 = vcmp.le.s32.totalorder %v71, %v209
    %vm221 = vcmp.le.s32.totalorder %v72, %v209
    %vm222 = vcmp.le.s32.totalorder %v73, %v209
    %vm223 = vcmp.le.s32.totalorder %v74, %v209
    %vm224 = vcmp.le.s32.totalorder %v75, %v209
    %vm225 = vcmp.le.s32.totalorder %v76, %v209
    %v226 = vsub.f32 %v161, 1.0
    %v227 = vsub.f32 %v164, 1.0
    %v228 = vsub.f32 %v167, 1.0
    %v229 = vsub.f32 %v170, 1.0
    %v230 = vsub.f32 %v173, 1.0
    %v231 = vsub.f32 %v176, 1.0
    %v232 = vsub.f32 %v179, 1.0
    %v233 = vsub.f32 %v182, 1.0
    %v234 = vsub.f32 %v185, 1.0
    %v235 = vsub.f32 %v188, 1.0
    %v236 = vsub.f32 %v191, 1.0
    %v237 = vsub.f32 %v194, 1.0
    %v238 = vsub.f32 %v197, 1.0
    %v239 = vsub.f32 %v200, 1.0
    %v240 = vsub.f32 %v203, 1.0
    %v241 = vsub.f32 %v206, 1.0
    %v242 = vand.u32 2147483647, %v226
    %v243 = vand.u32 2147483647, %v227
    %v244 = vand.u32 2147483647, %v228
    %v245 = vand.u32 2147483647, %v229
    %v246 = vand.u32 2147483647, %v230
    %v247 = vand.u32 2147483647, %v231
    %v248 = vand.u32 2147483647, %v232
    %v249 = vand.u32 2147483647, %v233
    %v250 = vand.u32 2147483647, %v234
    %v251 = vand.u32 2147483647, %v235
    %v252 = vand.u32 2147483647, %v236
    %v253 = vand.u32 2147483647, %v237
    %v254 = vand.u32 2147483647, %v238
    %v255 = vand.u32 2147483647, %v239
    %v256 = vand.u32 2147483647, %v240
    %v257 = vand.u32 2147483647, %v241
    %v258 = vsel %vm210, %v242, 0.0
    %v259 = vsel %vm211, %v243, 0.0
    %v260 = vsel %vm212, %v244, 0.0
    %v261 = vsel %vm213, %v245, 0.0
    %v262 = vsel %vm214, %v246, 0.0
    %v263 = vsel %vm215, %v247, 0.0
    %v264 = vsel %vm216, %v248, 0.0
    %v265 = vsel %vm217, %v249, 0.0
    %v266 = vsel %vm218, %v250, 0.0
    %v267 = vsel %vm219, %v251, 0.0
    %v268 = vsel %vm220, %v252, 0.0
    %v269 = vsel %vm221, %v253, 0.0
    %v270 = vsel %vm222, %v254, 0.0
    %v271 = vsel %vm223, %v255, 0.0
    %v272 = vsel %vm224, %v256, 0.0
    %v273 = vsel %vm225, %v257, 0.0
    %vm274 = vcmask 7168
    %v275 = vsel %vm274, %v258, 0.0
    %v276 = vsel %vm274, %v259, 0.0
    %v277 = vadd.f32 %v275, %v276
    %v278 = vsel %vm274, %v260, 0.0
    %v279 = vadd.f32 %v277, %v278
    %v280 = vsel %vm274, %v261, 0.0
    %v281 = vadd.f32 %v279, %v280
    %v282 = vsel %vm274, %v262, 0.0
    %v283 = vadd.f32 %v281, %v282
    %v284 = vsel %vm274, %v263, 0.0
    %v285 = vadd.f32 %v283, %v284
    %v286 = vsel %vm274, %v264, 0.0
    %v287 = vadd.f32 %v285, %v286
    %v288 = vsel %vm274, %v265, 0.0
    %v289 = vadd.f32 %v287, %v288
    %v290 = vsel %vm274, %v266, 0.0
    %v291 = vadd.f32 %v289, %v290
    %v292 = vsel %vm274, %v267, 0.0
    %v293 = vadd.f32 %v291, %v292
    %v294 = vsel %vm274, %v268, 0.0
    %v295 = vadd.f32 %v293, %v294
    %v296 = vsel %vm274, %v269, 0.0
    %v297 = vadd.f32 %v295, %v296
    %v298 = vsel %vm274, %v270, 0.0
    %v299 = vadd.f32 %v297, %v298
    %v300 = vsel %vm274, %v271, 0.0
    %v301 = vadd.f32 %v299, %v300
    %v302 = vsel %vm274, %v272, 0.0
    %v303 = vadd.f32 %v301, %v302
    %v304 = vsel %vm274, %v273, 0.0
    %v305 = vadd.f32 %v303, %v304
    %306 = vadd.xlane.f32.xlu0 %v305
    %v307 = vpop.xlane.xlu0 %306
    %v308 = vrot.slane %v307, 4
    %v309 = vadd.f32 %v307, %v308
    %v310 = vrot.slane %v309, 2
    %v311 = vadd.f32 %v309, %v310
    %v312 = vrot.slane %v311, 1
    %v313 = vadd.f32 %v311, %v312
    %s314 = vtos %v313
    %vm315 = vcmp.eq.s32.totalorder %v45, 0
    %vm316 = vcmp.eq.s32.totalorder %v78, 0
    %vm317 = vmand %vm315, %vm316
    %v318 = vstv %s314
    %v319 = vsel %vm317, %v318, 0.0
    %v320 = vadd.f32 %v319, 0.0
    %v321 = vld [vmem:[#allocation4 + $0x1] sm:$0x1]
    %v322 = vld [vmem:[#allocation7 + $0x1] sm:$0x1]
    %v323 = vld [vmem:[%s3 + $0x1] sm:$0x1]
    %v324 = vlaneseq
    %v325 = vshrl.u32 %v324, 7
    %v326 = vsub.s32 0, %v325
    %v327 = vrot.slane %v322, %v326
    %vm328 = vcmp.ge.s32.totalorder %v327, %v61
    %vm329 = vcmp.ge.s32.totalorder %v327, %v62
    %vm330 = vcmp.ge.s32.totalorder %v327, %v63
    %vm331 = vcmp.ge.s32.totalorder %v327, %v64
    %vm332 = vcmp.ge.s32.totalorder %v327, %v65
    %vm333 = vcmp.ge.s32.totalorder %v327, %v66
    %vm334 = vcmp.ge.s32.totalorder %v327, %v67
    %vm335 = vcmp.ge.s32.totalorder %v327, %v68
    %vm336 = vcmp.ge.s32.totalorder %v327, %v69
    %vm337 = vcmp.ge.s32.totalorder %v327, %v70
    %vm338 = vcmp.ge.s32.totalorder %v327, %v71
    %vm339 = vcmp.ge.s32.totalorder %v327, %v72
    %vm340 = vcmp.ge.s32.totalorder %v327, %v73
    %vm341 = vcmp.ge.s32.totalorder %v327, %v74
    %vm342 = vcmp.ge.s32.totalorder %v327, %v75
    %vm343 = vcmp.ge.s32.totalorder %v327, %v76
    %v344 = vlaneseq
    %v345 = vshrl.u32 %v344, 7
    %v346 = vsub.s32 0, %v345
    %v347 = vrot.slane %v323, %v346
    %vm348 = vcmp.le.s32.totalorder %v347, %v61
    %vm349 = vcmp.le.s32.totalorder %v347, %v62
    %vm350 = vcmp.le.s32.totalorder %v347, %v63
    %vm351 = vcmp.le.s32.totalorder %v347, %v64
    %vm352 = vcmp.le.s32.totalorder %v347, %v65
    %vm353 = vcmp.le.s32.totalorder %v347, %v66
    %vm354 = vcmp.le.s32.totalorder %v347, %v67
    %vm355 = vcmp.le.s32.totalorder %v347, %v68
    %vm356 = vcmp.le.s32.totalorder %v347, %v69
    %vm357 = vcmp.le.s32.totalorder %v347, %v70
    %vm358 = vcmp.le.s32.totalorder %v347, %v71
    %vm359 = vcmp.le.s32.totalorder %v347, %v72
    %vm360 = vcmp.le.s32.totalorder %v347, %v73
    %vm361 = vcmp.le.s32.totalorder %v347, %v74
    %vm362 = vcmp.le.s32.totalorder %v347, %v75
    %vm363 = vcmp.le.s32.totalorder %v347, %v76
    %vm364 = vmand %vm328, %vm348
    %vm365 = vmand %vm329, %vm349
    %vm366 = vmand %vm330, %vm350
    %vm367 = vmand %vm331, %vm351
    %vm368 = vmand %vm332, %vm352
    %vm369 = vmand %vm333, %vm353
    %vm370 = vmand %vm334, %vm354
    %vm371 = vmand %vm335, %vm355
    %vm372 = vmand %vm336, %vm356
    %vm373 = vmand %vm337, %vm357
    %vm374 = vmand %vm338, %vm358
    %vm375 = vmand %vm339, %vm359
    %vm376 = vmand %vm340, %vm360
    %vm377 = vmand %vm341, %vm361
    %vm378 = vmand %vm342, %vm362
    %vm379 = vmand %vm343, %vm363
    %v380 = vlaneseq
    %v381 = vshrl.u32 %v380, 7
    %v382 = vsub.s32 0, %v381
    %v383 = vrot.slane %v321, %v382
    %v384 = vsel %vm364, %v383, 0.0
    %v385 = vsel %vm365, %v383, 0.0
    %v386 = vsel %vm366, %v383, 0.0
    %v387 = vsel %vm367, %v383, 0.0
    %v388 = vsel %vm368, %v383, 0.0
    %v389 = vsel %vm369, %v383, 0.0
    %v390 = vsel %vm370, %v383, 0.0
    %v391 = vsel %vm371, %v383, 0.0
    %v392 = vsel %vm372, %v383, 0.0
    %v393 = vsel %vm373, %v383, 0.0
    %v394 = vsel %vm374, %v383, 0.0
    %v395 = vsel %vm375, %v383, 0.0
    %v396 = vsel %vm376, %v383, 0.0
    %v397 = vsel %vm377, %v383, 0.0
    %v398 = vsel %vm378, %v383, 0.0
    %v399 = vsel %vm379, %v383, 0.0
    %v400 = vsel %vm158, %v384, 0.0
    %401 = vadd.xlane.f32.xlu0 %v400
    %v402 = vpop.xlane.xlu0 %401
    %v403 = vsel %vm158, %v385, 0.0
    %404 = vadd.xlane.f32.xlu0 %v403
    %v405 = vpop.xlane.xlu0 %404
    %v406 = vsel %vm158, %v386, 0.0
    %407 = vadd.xlane.f32.xlu0 %v406
    %v408 = vpop.xlane.xlu0 %407
    %v409 = vsel %vm158, %v387, 0.0
    %410 = vadd.xlane.f32.xlu0 %v409
    %v411 = vpop.xlane.xlu0 %410
    %v412 = vsel %vm158, %v388, 0.0
    %413 = vadd.xlane.f32.xlu0 %v412
    %v414 = vpop.xlane.xlu0 %413
    %v415 = vsel %vm158, %v389, 0.0
    %416 = vadd.xlane.f32.xlu0 %v415
    %v417 = vpop.xlane.xlu0 %416
    %v418 = vsel %vm158, %v390, 0.0
    %419 = vadd.xlane.f32.xlu0 %v418
    %v420 = vpop.xlane.xlu0 %419
    %v421 = vsel %vm158, %v391, 0.0
    %422 = vadd.xlane.f32.xlu0 %v421
    %v423 = vpop.xlane.xlu0 %422
    %v424 = vsel %vm158, %v392, 0.0
    %425 = vadd.xlane.f32.xlu0 %v424
    %v426 = vpop.xlane.xlu0 %425
    %v427 = vsel %vm158, %v393, 0.0
    %428 = vadd.xlane.f32.xlu0 %v427
    %v429 = vpop.xlane.xlu0 %428
    %v430 = vsel %vm158, %v394, 0.0
    %431 = vadd.xlane.f32.xlu0 %v430
    %v432 = vpop.xlane.xlu0 %431
    %v433 = vsel %vm158, %v395, 0.0
    %434 = vadd.xlane.f32.xlu0 %v433
    %v435 = vpop.xlane.xlu0 %434
    %v436 = vsel %vm158, %v396, 0.0
    %437 = vadd.xlane.f32.xlu0 %v436
    %v438 = vpop.xlane.xlu0 %437
    %v439 = vsel %vm158, %v397, 0.0
    %440 = vadd.xlane.f32.xlu0 %v439
    %v441 = vpop.xlane.xlu0 %440
    %v442 = vsel %vm158, %v398, 0.0
    %443 = vadd.xlane.f32.xlu0 %v442
    %v444 = vpop.xlane.xlu0 %443
    %v445 = vsel %vm158, %v399, 0.0
    %446 = vadd.xlane.f32.xlu0 %v445
    %v447 = vpop.xlane.xlu0 %446
    %s448 = sadd.s32 %s207, 1
    %s449 = sld [smem:[#allocation3 + %s448]]
    %v450 = vstv %s449
    %vm451 = vcmp.le.s32.totalorder %v61, %v450
    %vm452 = vcmp.le.s32.totalorder %v62, %v450
    %vm453 = vcmp.le.s32.totalorder %v63, %v450
    %vm454 = vcmp.le.s32.totalorder %v64, %v450
    %vm455 = vcmp.le.s32.totalorder %v65, %v450
    %vm456 = vcmp.le.s32.totalorder %v66, %v450
    %vm457 = vcmp.le.s32.totalorder %v67, %v450
    %vm458 = vcmp.le.s32.totalorder %v68, %v450
    %vm459 = vcmp.le.s32.totalorder %v69, %v450
    %vm460 = vcmp.le.s32.totalorder %v70, %v450
    %vm461 = vcmp.le.s32.totalorder %v71, %v450
    %vm462 = vcmp.le.s32.totalorder %v72, %v450
    %vm463 = vcmp.le.s32.totalorder %v73, %v450
    %vm464 = vcmp.le.s32.totalorder %v74, %v450
    %vm465 = vcmp.le.s32.totalorder %v75, %v450
    %vm466 = vcmp.le.s32.totalorder %v76, %v450
    %v467 = vsub.f32 %v402, 1.0
    %v468 = vsub.f32 %v405, 1.0
    %v469 = vsub.f32 %v408, 1.0
    %v470 = vsub.f32 %v411, 1.0
    %v471 = vsub.f32 %v414, 1.0
    %v472 = vsub.f32 %v417, 1.0
    %v473 = vsub.f32 %v420, 1.0
    %v474 = vsub.f32 %v423, 1.0
    %v475 = vsub.f32 %v426, 1.0
    %v476 = vsub.f32 %v429, 1.0
    %v477 = vsub.f32 %v432, 1.0
    %v478 = vsub.f32 %v435, 1.0
    %v479 = vsub.f32 %v438, 1.0
    %v480 = vsub.f32 %v441, 1.0
    %v481 = vsub.f32 %v444, 1.0
    %v482 = vsub.f32 %v447, 1.0
    %v483 = vand.u32 2147483647, %v467
    %v484 = vand.u32 2147483647, %v468
    %v485 = vand.u32 2147483647, %v469
    %v486 = vand.u32 2147483647, %v470
    %v487 = vand.u32 2147483647, %v471
    %v488 = vand.u32 2147483647, %v472
    %v489 = vand.u32 2147483647, %v473
    %v490 = vand.u32 2147483647, %v474
    %v491 = vand.u32 2147483647, %v475
    %v492 = vand.u32 2147483647, %v476
    %v493 = vand.u32 2147483647, %v477
    %v494 = vand.u32 2147483647, %v478
    %v495 = vand.u32 2147483647, %v479
    %v496 = vand.u32 2147483647, %v480
    %v497 = vand.u32 2147483647, %v481
    %v498 = vand.u32 2147483647, %v482
    %v499 = vsel %vm451, %v483, 0.0
    %v500 = vsel %vm452, %v484, 0.0
    %v501 = vsel %vm453, %v485, 0.0
    %v502 = vsel %vm454, %v486, 0.0
    %v503 = vsel %vm455, %v487, 0.0
    %v504 = vsel %vm456, %v488, 0.0
    %v505 = vsel %vm457, %v489, 0.0
    %v506 = vsel %vm458, %v490, 0.0
    %v507 = vsel %vm459, %v491, 0.0
    %v508 = vsel %vm460, %v492, 0.0
    %v509 = vsel %vm461, %v493, 0.0
    %v510 = vsel %vm462, %v494, 0.0
    %v511 = vsel %vm463, %v495, 0.0
    %v512 = vsel %vm464, %v496, 0.0
    %v513 = vsel %vm465, %v497, 0.0
    %v514 = vsel %vm466, %v498, 0.0
    %v515 = vsel %vm274, %v499, 0.0
    %v516 = vsel %vm274, %v500, 0.0
    %v517 = vadd.f32 %v515, %v516
    %v518 = vsel %vm274, %v501, 0.0
    %v519 = vadd.f32 %v517, %v518
    %v520 = vsel %vm274, %v502, 0.0
    %v521 = vadd.f32 %v519, %v520
    %v522 = vsel %vm274, %v503, 0.0
    %v523 = vadd.f32 %v521, %v522
    %v524 = vsel %vm274, %v504, 0.0
    %v525 = vadd.f32 %v523, %v524
    %v526 = vsel %vm274, %v505, 0.0
    %v527 = vadd.f32 %v525, %v526
    %v528 = vsel %vm274, %v506, 0.0
    %v529 = vadd.f32 %v527, %v528
    %v530 = vsel %vm274, %v507, 0.0
    %v531 = vadd.f32 %v529, %v530
    %v532 = vsel %vm274, %v508, 0.0
    %v533 = vadd.f32 %v531, %v532
    %v534 = vsel %vm274, %v509, 0.0
    %v535 = vadd.f32 %v533, %v534
    %v536 = vsel %vm274, %v510, 0.0
    %v537 = vadd.f32 %v535, %v536
    %v538 = vsel %vm274, %v511, 0.0
    %v539 = vadd.f32 %v537, %v538
    %v540 = vsel %vm274, %v512, 0.0
    %v541 = vadd.f32 %v539, %v540
    %v542 = vsel %vm274, %v513, 0.0
    %v543 = vadd.f32 %v541, %v542
    %v544 = vsel %vm274, %v514, 0.0
    %v545 = vadd.f32 %v543, %v544
    %546 = vadd.xlane.f32.xlu0 %v545
    %v547 = vpop.xlane.xlu0 %546
    %v548 = vrot.slane %v547, 4
    %v549 = vadd.f32 %v547, %v548
    %v550 = vrot.slane %v549, 2
    %v551 = vadd.f32 %v549, %v550
    %v552 = vrot.slane %v551, 1
    %v553 = vadd.f32 %v551, %v552
    %s554 = vtos %v553
    %vm555 = vcmp.eq.s32.totalorder %v45, 1
    %vm556 = vmand %vm555, %vm316
    %v557 = vstv %s554
    %v558 = vsel %vm556, %v557, 0.0
    %v559 = vadd.f32 %v320, %v558
    %v560 = vld [vmem:[#allocation4 + $0x2] sm:$0x1]
    %v561 = vld [vmem:[#allocation7 + $0x2] sm:$0x1]
    %v562 = vld [vmem:[%s3 + $0x2] sm:$0x1]
    %v563 = vlaneseq
    %v564 = vshrl.u32 %v563, 7
    %v565 = vsub.s32 0, %v564
    %v566 = vrot.slane %v561, %v565
    %vm567 = vcmp.ge.s32.totalorder %v566, %v61
    %vm568 = vcmp.ge.s32.totalorder %v566, %v62
    %vm569 = vcmp.ge.s32.totalorder %v566, %v63
    %vm570 = vcmp.ge.s32.totalorder %v566, %v64
    %vm571 = vcmp.ge.s32.totalorder %v566, %v65
    %vm572 = vcmp.ge.s32.totalorder %v566, %v66
    %vm573 = vcmp.ge.s32.totalorder %v566, %v67
    %vm574 = vcmp.ge.s32.totalorder %v566, %v68
    %vm575 = vcmp.ge.s32.totalorder %v566, %v69
    %vm576 = vcmp.ge.s32.totalorder %v566, %v70
    %vm577 = vcmp.ge.s32.totalorder %v566, %v71
    %vm578 = vcmp.ge.s32.totalorder %v566, %v72
    %vm579 = vcmp.ge.s32.totalorder %v566, %v73
    %vm580 = vcmp.ge.s32.totalorder %v566, %v74
    %vm581 = vcmp.ge.s32.totalorder %v566, %v75
    %vm582 = vcmp.ge.s32.totalorder %v566, %v76
    %v583 = vlaneseq
    %v584 = vshrl.u32 %v583, 7
    %v585 = vsub.s32 0, %v584
    %v586 = vrot.slane %v562, %v585
    %vm587 = vcmp.le.s32.totalorder %v586, %v61
    %vm588 = vcmp.le.s32.totalorder %v586, %v62
    %vm589 = vcmp.le.s32.totalorder %v586, %v63
    %vm590 = vcmp.le.s32.totalorder %v586, %v64
    %vm591 = vcmp.le.s32.totalorder %v586, %v65
    %vm592 = vcmp.le.s32.totalorder %v586, %v66
    %vm593 = vcmp.le.s32.totalorder %v586, %v67
    %vm594 = vcmp.le.s32.totalorder %v586, %v68
    %vm595 = vcmp.le.s32.totalorder %v586, %v69
    %vm596 = vcmp.le.s32.totalorder %v586, %v70
    %vm597 = vcmp.le.s32.totalorder %v586, %v71
    %vm598 = vcmp.le.s32.totalorder %v586, %v72
    %vm599 = vcmp.le.s32.totalorder %v586, %v73
    %vm600 = vcmp.le.s32.totalorder %v586, %v74
    %vm601 = vcmp.le.s32.totalorder %v586, %v75
    %vm602 = vcmp.le.s32.totalorder %v586, %v76
    %vm603 = vmand %vm567, %vm587
    %vm604 = vmand %vm568, %vm588
    %vm605 = vmand %vm569, %vm589
    %vm606 = vmand %vm570, %vm590
    %vm607 = vmand %vm571, %vm591
    %vm608 = vmand %vm572, %vm592
    %vm609 = vmand %vm573, %vm593
    %vm610 = vmand %vm574, %vm594
    %vm611 = vmand %vm575, %vm595
    %vm612 = vmand %vm576, %vm596
    %vm613 = vmand %vm577, %vm597
    %vm614 = vmand %vm578, %vm598
    %vm615 = vmand %vm579, %vm599
    %vm616 = vmand %vm580, %vm600
    %vm617 = vmand %vm581, %vm601
    %vm618 = vmand %vm582, %vm602
    %v619 = vlaneseq
    %v620 = vshrl.u32 %v619, 7
    %v621 = vsub.s32 0, %v620
    %v622 = vrot.slane %v560, %v621
    %v623 = vsel %vm603, %v622, 0.0
    %v624 = vsel %vm604, %v622, 0.0
    %v625 = vsel %vm605, %v622, 0.0
    %v626 = vsel %vm606, %v622, 0.0
    %v627 = vsel %vm607, %v622, 0.0
    %v628 = vsel %vm608, %v622, 0.0
    %v629 = vsel %vm609, %v622, 0.0
    %v630 = vsel %vm610, %v622, 0.0
    %v631 = vsel %vm611, %v622, 0.0
    %v632 = vsel %vm612, %v622, 0.0
    %v633 = vsel %vm613, %v622, 0.0
    %v634 = vsel %vm614, %v622, 0.0
    %v635 = vsel %vm615, %v622, 0.0
    %v636 = vsel %vm616, %v622, 0.0
    %v637 = vsel %vm617, %v622, 0.0
    %v638 = vsel %vm618, %v622, 0.0
    %v639 = vsel %vm158, %v623, 0.0
    %640 = vadd.xlane.f32.xlu0 %v639
    %v641 = vpop.xlane.xlu0 %640
    %v642 = vsel %vm158, %v624, 0.0
    %643 = vadd.xlane.f32.xlu0 %v642
    %v644 = vpop.xlane.xlu0 %643
    %v645 = vsel %vm158, %v625, 0.0
    %646 = vadd.xlane.f32.xlu0 %v645
    %v647 = vpop.xlane.xlu0 %646
    %v648 = vsel %vm158, %v626, 0.0
    %649 = vadd.xlane.f32.xlu0 %v648
    %v650 = vpop.xlane.xlu0 %649
    %v651 = vsel %vm158, %v627, 0.0
    %652 = vadd.xlane.f32.xlu0 %v651
    %v653 = vpop.xlane.xlu0 %652
    %v654 = vsel %vm158, %v628, 0.0
    %655 = vadd.xlane.f32.xlu0 %v654
    %v656 = vpop.xlane.xlu0 %655
    %v657 = vsel %vm158, %v629, 0.0
    %658 = vadd.xlane.f32.xlu0 %v657
    %v659 = vpop.xlane.xlu0 %658
    %v660 = vsel %vm158, %v630, 0.0
    %661 = vadd.xlane.f32.xlu0 %v660
    %v662 = vpop.xlane.xlu0 %661
    %v663 = vsel %vm158, %v631, 0.0
    %664 = vadd.xlane.f32.xlu0 %v663
    %v665 = vpop.xlane.xlu0 %664
    %v666 = vsel %vm158, %v632, 0.0
    %667 = vadd.xlane.f32.xlu0 %v666
    %v668 = vpop.xlane.xlu0 %667
    %v669 = vsel %vm158, %v633, 0.0
    %670 = vadd.xlane.f32.xlu0 %v669
    %v671 = vpop.xlane.xlu0 %670
    %v672 = vsel %vm158, %v634, 0.0
    %673 = vadd.xlane.f32.xlu0 %v672
    %v674 = vpop.xlane.xlu0 %673
    %v675 = vsel %vm158, %v635, 0.0
    %676 = vadd.xlane.f32.xlu0 %v675
    %v677 = vpop.xlane.xlu0 %676
    %v678 = vsel %vm158, %v636, 0.0
    %679 = vadd.xlane.f32.xlu0 %v678
    %v680 = vpop.xlane.xlu0 %679
    %v681 = vsel %vm158, %v637, 0.0
    %682 = vadd.xlane.f32.xlu0 %v681
    %v683 = vpop.xlane.xlu0 %682
    %v684 = vsel %vm158, %v638, 0.0
    %685 = vadd.xlane.f32.xlu0 %v684
    %v686 = vpop.xlane.xlu0 %685
    %s687 = sadd.s32 %s207, 2
    %s688 = sld [smem:[#allocation3 + %s687]]
    %v689 = vstv %s688
    %vm690 = vcmp.le.s32.totalorder %v61, %v689
    %vm691 = vcmp.le.s32.totalorder %v62, %v689
    %vm692 = vcmp.le.s32.totalorder %v63, %v689
    %vm693 = vcmp.le.s32.totalorder %v64, %v689
    %vm694 = vcmp.le.s32.totalorder %v65, %v689
    %vm695 = vcmp.le.s32.totalorder %v66, %v689
    %vm696 = vcmp.le.s32.totalorder %v67, %v689
    %vm697 = vcmp.le.s32.totalorder %v68, %v689
    %vm698 = vcmp.le.s32.totalorder %v69, %v689
    %vm699 = vcmp.le.s32.totalorder %v70, %v689
    %vm700 = vcmp.le.s32.totalorder %v71, %v689
    %vm701 = vcmp.le.s32.totalorder %v72, %v689
    %vm702 = vcmp.le.s32.totalorder %v73, %v689
    %vm703 = vcmp.le.s32.totalorder %v74, %v689
    %vm704 = vcmp.le.s32.totalorder %v75, %v689
    %vm705 = vcmp.le.s32.totalorder %v76, %v689
    %v706 = vsub.f32 %v641, 1.0
    %v707 = vsub.f32 %v644, 1.0
    %v708 = vsub.f32 %v647, 1.0
    %v709 = vsub.f32 %v650, 1.0
    %v710 = vsub.f32 %v653, 1.0
    %v711 = vsub.f32 %v656, 1.0
    %v712 = vsub.f32 %v659, 1.0
    %v713 = vsub.f32 %v662, 1.0
    %v714 = vsub.f32 %v665, 1.0
    %v715 = vsub.f32 %v668, 1.0
    %v716 = vsub.f32 %v671, 1.0
    %v717 = vsub.f32 %v674, 1.0
    %v718 = vsub.f32 %v677, 1.0
    %v719 = vsub.f32 %v680, 1.0
    %v720 = vsub.f32 %v683, 1.0
    %v721 = vsub.f32 %v686, 1.0
    %v722 = vand.u32 2147483647, %v706
    %v723 = vand.u32 2147483647, %v707
    %v724 = vand.u32 2147483647, %v708
    %v725 = vand.u32 2147483647, %v709
    %v726 = vand.u32 2147483647, %v710
    %v727 = vand.u32 2147483647, %v711
    %v728 = vand.u32 2147483647, %v712
    %v729 = vand.u32 2147483647, %v713
    %v730 = vand.u32 2147483647, %v714
    %v731 = vand.u32 2147483647, %v715
    %v732 = vand.u32 2147483647, %v716
    %v733 = vand.u32 2147483647, %v717
    %v734 = vand.u32 2147483647, %v718
    %v735 = vand.u32 2147483647, %v719
    %v736 = vand.u32 2147483647, %v720
    %v737 = vand.u32 2147483647, %v721
    %v738 = vsel %vm690, %v722, 0.0
    %v739 = vsel %vm691, %v723, 0.0
    %v740 = vsel %vm692, %v724, 0.0
    %v741 = vsel %vm693, %v725, 0.0
    %v742 = vsel %vm694, %v726, 0.0
    %v743 = vsel %vm695, %v727, 0.0
    %v744 = vsel %vm696, %v728, 0.0
    %v745 = vsel %vm697, %v729, 0.0
    %v746 = vsel %vm698, %v730, 0.0
    %v747 = vsel %vm699, %v731, 0.0
    %v748 = vsel %vm700, %v732, 0.0
    %v749 = vsel %vm701, %v733, 0.0
    %v750 = vsel %vm702, %v734, 0.0
    %v751 = vsel %vm703, %v735, 0.0
    %v752 = vsel %vm704, %v736, 0.0
    %v753 = vsel %vm705, %v737, 0.0
    %v754 = vsel %vm274, %v738, 0.0
    %v755 = vsel %vm274, %v739, 0.0
    %v756 = vadd.f32 %v754, %v755
    %v757 = vsel %vm274, %v740, 0.0
    %v758 = vadd.f32 %v756, %v757
    %v759 = vsel %vm274, %v741, 0.0
    %v760 = vadd.f32 %v758, %v759
    %v761 = vsel %vm274, %v742, 0.0
    %v762 = vadd.f32 %v760, %v761
    %v763 = vsel %vm274, %v743, 0.0
    %v764 = vadd.f32 %v762, %v763
    %v765 = vsel %vm274, %v744, 0.0
    %v766 = vadd.f32 %v764, %v765
    %v767 = vsel %vm274, %v745, 0.0
    %v768 = vadd.f32 %v766, %v767
    %v769 = vsel %vm274, %v746, 0.0
    %v770 = vadd.f32 %v768, %v769
    %v771 = vsel %vm274, %v747, 0.0
    %v772 = vadd.f32 %v770, %v771
    %v773 = vsel %vm274, %v748, 0.0
    %v774 = vadd.f32 %v772, %v773
    %v775 = vsel %vm274, %v749, 0.0
    %v776 = vadd.f32 %v774, %v775
    %v777 = vsel %vm274, %v750, 0.0
    %v778 = vadd.f32 %v776, %v777
    %v779 = vsel %vm274, %v751, 0.0
    %v780 = vadd.f32 %v778, %v779
    %v781 = vsel %vm274, %v752, 0.0
    %v782 = vadd.f32 %v780, %v781
    %v783 = vsel %vm274, %v753, 0.0
    %v784 = vadd.f32 %v782, %v783
    %785 = vadd.xlane.f32.xlu0 %v784
    %v786 = vpop.xlane.xlu0 %785
    %v787 = vrot.slane %v786, 4
    %v788 = vadd.f32 %v786, %v787
    %v789 = vrot.slane %v788, 2
    %v790 = vadd.f32 %v788, %v789
    %v791 = vrot.slane %v790, 1
    %v792 = vadd.f32 %v790, %v791
    %s793 = vtos %v792
    %vm794 = vcmp.eq.s32.totalorder %v45, 2
    %vm795 = vmand %vm794, %vm316
    %v796 = vstv %s793
    %v797 = vsel %vm795, %v796, 0.0
    %v798 = vadd.f32 %v559, %v797
    %v799 = vld [vmem:[#allocation4 + $0x3] sm:$0x1]
    %v800 = vld [vmem:[#allocation7 + $0x3] sm:$0x1]
    %v801 = vld [vmem:[%s3 + $0x3] sm:$0x1]
    %v802 = vlaneseq
    %v803 = vshrl.u32 %v802, 7
    %v804 = vsub.s32 0, %v803
    %v805 = vrot.slane %v800, %v804
    %vm806 = vcmp.ge.s32.totalorder %v805, %v61
    %vm807 = vcmp.ge.s32.totalorder %v805, %v62
    %vm808 = vcmp.ge.s32.totalorder %v805, %v63
    %vm809 = vcmp.ge.s32.totalorder %v805, %v64
    %vm810 = vcmp.ge.s32.totalorder %v805, %v65
    %vm811 = vcmp.ge.s32.totalorder %v805, %v66
    %vm812 = vcmp.ge.s32.totalorder %v805, %v67
    %vm813 = vcmp.ge.s32.totalorder %v805, %v68
    %vm814 = vcmp.ge.s32.totalorder %v805, %v69
    %vm815 = vcmp.ge.s32.totalorder %v805, %v70
    %vm816 = vcmp.ge.s32.totalorder %v805, %v71
    %vm817 = vcmp.ge.s32.totalorder %v805, %v72
    %vm818 = vcmp.ge.s32.totalorder %v805, %v73
    %vm819 = vcmp.ge.s32.totalorder %v805, %v74
    %vm820 = vcmp.ge.s32.totalorder %v805, %v75
    %vm821 = vcmp.ge.s32.totalorder %v805, %v76
    %v822 = vlaneseq
    %v823 = vshrl.u32 %v822, 7
    %v824 = vsub.s32 0, %v823
    %v825 = vrot.slane %v801, %v824
    %vm826 = vcmp.le.s32.totalorder %v825, %v61
    %vm827 = vcmp.le.s32.totalorder %v825, %v62
    %vm828 = vcmp.le.s32.totalorder %v825, %v63
    %vm829 = vcmp.le.s32.totalorder %v825, %v64
    %vm830 = vcmp.le.s32.totalorder %v825, %v65
    %vm831 = vcmp.le.s32.totalorder %v825, %v66
    %vm832 = vcmp.le.s32.totalorder %v825, %v67
    %vm833 = vcmp.le.s32.totalorder %v825, %v68
    %vm834 = vcmp.le.s32.totalorder %v825, %v69
    %vm835 = vcmp.le.s32.totalorder %v825, %v70
    %vm836 = vcmp.le.s32.totalorder %v825, %v71
    %vm837 = vcmp.le.s32.totalorder %v825, %v72
    %vm838 = vcmp.le.s32.totalorder %v825, %v73
    %vm839 = vcmp.le.s32.totalorder %v825, %v74
    %vm840 = vcmp.le.s32.totalorder %v825, %v75
    %vm841 = vcmp.le.s32.totalorder %v825, %v76
    %vm842 = vmand %vm806, %vm826
    %vm843 = vmand %vm807, %vm827
    %vm844 = vmand %vm808, %vm828
    %vm845 = vmand %vm809, %vm829
    %vm846 = vmand %vm810, %vm830
    %vm847 = vmand %vm811, %vm831
    %vm848 = vmand %vm812, %vm832
    %vm849 = vmand %vm813, %vm833
    %vm850 = vmand %vm814, %vm834
    %vm851 = vmand %vm815, %vm835
    %vm852 = vmand %vm816, %vm836
    %vm853 = vmand %vm817, %vm837
    %vm854 = vmand %vm818, %vm838
    %vm855 = vmand %vm819, %vm839
    %vm856 = vmand %vm820, %vm840
    %vm857 = vmand %vm821, %vm841
    %v858 = vlaneseq
    %v859 = vshrl.u32 %v858, 7
    %v860 = vsub.s32 0, %v859
    %v861 = vrot.slane %v799, %v860
    %v862 = vsel %vm842, %v861, 0.0
    %v863 = vsel %vm843, %v861, 0.0
    %v864 = vsel %vm844, %v861, 0.0
    %v865 = vsel %vm845, %v861, 0.0
    %v866 = vsel %vm846, %v861, 0.0
    %v867 = vsel %vm847, %v861, 0.0
    %v868 = vsel %vm848, %v861, 0.0
    %v869 = vsel %vm849, %v861, 0.0
    %v870 = vsel %vm850, %v861, 0.0
    %v871 = vsel %vm851, %v861, 0.0
    %v872 = vsel %vm852, %v861, 0.0
    %v873 = vsel %vm853, %v861, 0.0
    %v874 = vsel %vm854, %v861, 0.0
    %v875 = vsel %vm855, %v861, 0.0
    %v876 = vsel %vm856, %v861, 0.0
    %v877 = vsel %vm857, %v861, 0.0
    %v878 = vsel %vm158, %v862, 0.0
    %879 = vadd.xlane.f32.xlu0 %v878
    %v880 = vpop.xlane.xlu0 %879
    %v881 = vsel %vm158, %v863, 0.0
    %882 = vadd.xlane.f32.xlu0 %v881
    %v883 = vpop.xlane.xlu0 %882
    %v884 = vsel %vm158, %v864, 0.0
    %885 = vadd.xlane.f32.xlu0 %v884
    %v886 = vpop.xlane.xlu0 %885
    %v887 = vsel %vm158, %v865, 0.0
    %888 = vadd.xlane.f32.xlu0 %v887
    %v889 = vpop.xlane.xlu0 %888
    %v890 = vsel %vm158, %v866, 0.0
    %891 = vadd.xlane.f32.xlu0 %v890
    %v892 = vpop.xlane.xlu0 %891
    %v893 = vsel %vm158, %v867, 0.0
    %894 = vadd.xlane.f32.xlu0 %v893
    %v895 = vpop.xlane.xlu0 %894
    %v896 = vsel %vm158, %v868, 0.0
    %897 = vadd.xlane.f32.xlu0 %v896
    %v898 = vpop.xlane.xlu0 %897
    %v899 = vsel %vm158, %v869, 0.0
    %900 = vadd.xlane.f32.xlu0 %v899
    %v901 = vpop.xlane.xlu0 %900
    %v902 = vsel %vm158, %v870, 0.0
    %903 = vadd.xlane.f32.xlu0 %v902
    %v904 = vpop.xlane.xlu0 %903
    %v905 = vsel %vm158, %v871, 0.0
    %906 = vadd.xlane.f32.xlu0 %v905
    %v907 = vpop.xlane.xlu0 %906
    %v908 = vsel %vm158, %v872, 0.0
    %909 = vadd.xlane.f32.xlu0 %v908
    %v910 = vpop.xlane.xlu0 %909
    %v911 = vsel %vm158, %v873, 0.0
    %912 = vadd.xlane.f32.xlu0 %v911
    %v913 = vpop.xlane.xlu0 %912
    %v914 = vsel %vm158, %v874, 0.0
    %915 = vadd.xlane.f32.xlu0 %v914
    %v916 = vpop.xlane.xlu0 %915
    %v917 = vsel %vm158, %v875, 0.0
    %918 = vadd.xlane.f32.xlu0 %v917
    %v919 = vpop.xlane.xlu0 %918
    %v920 = vsel %vm158, %v876, 0.0
    %921 = vadd.xlane.f32.xlu0 %v920
    %v922 = vpop.xlane.xlu0 %921
    %v923 = vsel %vm158, %v877, 0.0
    %924 = vadd.xlane.f32.xlu0 %v923
    %v925 = vpop.xlane.xlu0 %924
    %s926 = sadd.s32 %s207, 3
    %s927 = sld [smem:[#allocation3 + %s926]]
    %v928 = vstv %s927
    %vm929 = vcmp.le.s32.totalorder %v61, %v928
    %vm930 = vcmp.le.s32.totalorder %v62, %v928
    %vm931 = vcmp.le.s32.totalorder %v63, %v928
    %vm932 = vcmp.le.s32.totalorder %v64, %v928
    %vm933 = vcmp.le.s32.totalorder %v65, %v928
    %vm934 = vcmp.le.s32.totalorder %v66, %v928
    %vm935 = vcmp.le.s32.totalorder %v67, %v928
    %vm936 = vcmp.le.s32.totalorder %v68, %v928
    %vm937 = vcmp.le.s32.totalorder %v69, %v928
    %vm938 = vcmp.le.s32.totalorder %v70, %v928
    %vm939 = vcmp.le.s32.totalorder %v71, %v928
    %vm940 = vcmp.le.s32.totalorder %v72, %v928
    %vm941 = vcmp.le.s32.totalorder %v73, %v928
    %vm942 = vcmp.le.s32.totalorder %v74, %v928
    %vm943 = vcmp.le.s32.totalorder %v75, %v928
    %vm944 = vcmp.le.s32.totalorder %v76, %v928
    %v945 = vsub.f32 %v880, 1.0
    %v946 = vsub.f32 %v883, 1.0
    %v947 = vsub.f32 %v886, 1.0
    %v948 = vsub.f32 %v889, 1.0
    %v949 = vsub.f32 %v892, 1.0
    %v950 = vsub.f32 %v895, 1.0
    %v951 = vsub.f32 %v898, 1.0
    %v952 = vsub.f32 %v901, 1.0
    %v953 = vsub.f32 %v904, 1.0
    %v954 = vsub.f32 %v907, 1.0
    %v955 = vsub.f32 %v910, 1.0
    %v956 = vsub.f32 %v913, 1.0
    %v957 = vsub.f32 %v916, 1.0
    %v958 = vsub.f32 %v919, 1.0
    %v959 = vsub.f32 %v922, 1.0
    %v960 = vsub.f32 %v925, 1.0
    %v961 = vand.u32 2147483647, %v945
    %v962 = vand.u32 2147483647, %v946
    %v963 = vand.u32 2147483647, %v947
    %v964 = vand.u32 2147483647, %v948
    %v965 = vand.u32 2147483647, %v949
    %v966 = vand.u32 2147483647, %v950
    %v967 = vand.u32 2147483647, %v951
    %v968 = vand.u32 2147483647, %v952
    %v969 = vand.u32 2147483647, %v953
    %v970 = vand.u32 2147483647, %v954
    %v971 = vand.u32 2147483647, %v955
    %v972 = vand.u32 2147483647, %v956
    %v973 = vand.u32 2147483647, %v957
    %v974 = vand.u32 2147483647, %v958
    %v975 = vand.u32 2147483647, %v959
    %v976 = vand.u32 2147483647, %v960
    %v977 = vsel %vm929, %v961, 0.0
    %v978 = vsel %vm930, %v962, 0.0
    %v979 = vsel %vm931, %v963, 0.0
    %v980 = vsel %vm932, %v964, 0.0
    %v981 = vsel %vm933, %v965, 0.0
    %v982 = vsel %vm934, %v966, 0.0
    %v983 = vsel %vm935, %v967, 0.0
    %v984 = vsel %vm936, %v968, 0.0
    %v985 = vsel %vm937, %v969, 0.0
    %v986 = vsel %vm938, %v970, 0.0
    %v987 = vsel %vm939, %v971, 0.0
    %v988 = vsel %vm940, %v972, 0.0
    %v989 = vsel %vm941, %v973, 0.0
    %v990 = vsel %vm942, %v974, 0.0
    %v991 = vsel %vm943, %v975, 0.0
    %v992 = vsel %vm944, %v976, 0.0
    %v993 = vsel %vm274, %v977, 0.0
    %v994 = vsel %vm274, %v978, 0.0
    %v995 = vadd.f32 %v993, %v994
    %v996 = vsel %vm274, %v979, 0.0
    %v997 = vadd.f32 %v995, %v996
    %v998 = vsel %vm274, %v980, 0.0
    %v999 = vadd.f32 %v997, %v998
    %v1000 = vsel %vm274, %v981, 0.0
    %v1001 = vadd.f32 %v999, %v1000
    %v1002 = vsel %vm274, %v982, 0.0
    %v1003 = vadd.f32 %v1001, %v1002
    %v1004 = vsel %vm274, %v983, 0.0
    %v1005 = vadd.f32 %v1003, %v1004
    %v1006 = vsel %vm274, %v984, 0.0
    %v1007 = vadd.f32 %v1005, %v1006
    %v1008 = vsel %vm274, %v985, 0.0
    %v1009 = vadd.f32 %v1007, %v1008
    %v1010 = vsel %vm274, %v986, 0.0
    %v1011 = vadd.f32 %v1009, %v1010
    %v1012 = vsel %vm274, %v987, 0.0
    %v1013 = vadd.f32 %v1011, %v1012
    %v1014 = vsel %vm274, %v988, 0.0
    %v1015 = vadd.f32 %v1013, %v1014
    %v1016 = vsel %vm274, %v989, 0.0
    %v1017 = vadd.f32 %v1015, %v1016
    %v1018 = vsel %vm274, %v990, 0.0
    %v1019 = vadd.f32 %v1017, %v1018
    %v1020 = vsel %vm274, %v991, 0.0
    %v1021 = vadd.f32 %v1019, %v1020
    %v1022 = vsel %vm274, %v992, 0.0
    %v1023 = vadd.f32 %v1021, %v1022
    %1024 = vadd.xlane.f32.xlu0 %v1023
    %v1025 = vpop.xlane.xlu0 %1024
    %v1026 = vrot.slane %v1025, 4
    %v1027 = vadd.f32 %v1025, %v1026
    %v1028 = vrot.slane %v1027, 2
    %v1029 = vadd.f32 %v1027, %v1028
    %v1030 = vrot.slane %v1029, 1
    %v1031 = vadd.f32 %v1029, %v1030
    %s1032 = vtos %v1031
    %vm1033 = vcmp.eq.s32.totalorder %v45, 3
    %vm1034 = vmand %vm1033, %vm316
    %v1035 = vstv %s1032
    %v1036 = vsel %vm1034, %v1035, 0.0
    %v1037 = vadd.f32 %v798, %v1036
    %v1038 = vld [vmem:[#allocation4 + $0x4] sm:$0x1]
    %v1039 = vld [vmem:[#allocation7 + $0x4] sm:$0x1]
    %v1040 = vld [vmem:[%s3 + $0x4] sm:$0x1]
    %v1041 = vlaneseq
    %v1042 = vshrl.u32 %v1041, 7
    %v1043 = vsub.s32 0, %v1042
    %v1044 = vrot.slane %v1039, %v1043
    %vm1045 = vcmp.ge.s32.totalorder %v1044, %v61
    %vm1046 = vcmp.ge.s32.totalorder %v1044, %v62
    %vm1047 = vcmp.ge.s32.totalorder %v1044, %v63
    %vm1048 = vcmp.ge.s32.totalorder %v1044, %v64
    %vm1049 = vcmp.ge.s32.totalorder %v1044, %v65
    %vm1050 = vcmp.ge.s32.totalorder %v1044, %v66
    %vm1051 = vcmp.ge.s32.totalorder %v1044, %v67
    %vm1052 = vcmp.ge.s32.totalorder %v1044, %v68
    %vm1053 = vcmp.ge.s32.totalorder %v1044, %v69
    %vm1054 = vcmp.ge.s32.totalorder %v1044, %v70
    %vm1055 = vcmp.ge.s32.totalorder %v1044, %v71
    %vm1056 = vcmp.ge.s32.totalorder %v1044, %v72
    %vm1057 = vcmp.ge.s32.totalorder %v1044, %v73
    %vm1058 = vcmp.ge.s32.totalorder %v1044, %v74
    %vm1059 = vcmp.ge.s32.totalorder %v1044, %v75
    %vm1060 = vcmp.ge.s32.totalorder %v1044, %v76
    %v1061 = vlaneseq
    %v1062 = vshrl.u32 %v1061, 7
    %v1063 = vsub.s32 0, %v1062
    %v1064 = vrot.slane %v1040, %v1063
    %vm1065 = vcmp.le.s32.totalorder %v1064, %v61
    %vm1066 = vcmp.le.s32.totalorder %v1064, %v62
    %vm1067 = vcmp.le.s32.totalorder %v1064, %v63
    %vm1068 = vcmp.le.s32.totalorder %v1064, %v64
    %vm1069 = vcmp.le.s32.totalorder %v1064, %v65
    %vm1070 = vcmp.le.s32.totalorder %v1064, %v66
    %vm1071 = vcmp.le.s32.totalorder %v1064, %v67
    %vm1072 = vcmp.le.s32.totalorder %v1064, %v68
    %vm1073 = vcmp.le.s32.totalorder %v1064, %v69
    %vm1074 = vcmp.le.s32.totalorder %v1064, %v70
    %vm1075 = vcmp.le.s32.totalorder %v1064, %v71
    %vm1076 = vcmp.le.s32.totalorder %v1064, %v72
    %vm1077 = vcmp.le.s32.totalorder %v1064, %v73
    %vm1078 = vcmp.le.s32.totalorder %v1064, %v74
    %vm1079 = vcmp.le.s32.totalorder %v1064, %v75
    %vm1080 = vcmp.le.s32.totalorder %v1064, %v76
    %vm1081 = vmand %vm1045, %vm1065
    %vm1082 = vmand %vm1046, %vm1066
    %vm1083 = vmand %vm1047, %vm1067
    %vm1084 = vmand %vm1048, %vm1068
    %vm1085 = vmand %vm1049, %vm1069
    %vm1086 = vmand %vm1050, %vm1070
    %vm1087 = vmand %vm1051, %vm1071
    %vm1088 = vmand %vm1052, %vm1072
    %vm1089 = vmand %vm1053, %vm1073
    %vm1090 = vmand %vm1054, %vm1074
    %vm1091 = vmand %vm1055, %vm1075
    %vm1092 = vmand %vm1056, %vm1076
    %vm1093 = vmand %vm1057, %vm1077
    %vm1094 = vmand %vm1058, %vm1078
    %vm1095 = vmand %vm1059, %vm1079
    %vm1096 = vmand %vm1060, %vm1080
    %v1097 = vlaneseq
    %v1098 = vshrl.u32 %v1097, 7
    %v1099 = vsub.s32 0, %v1098
    %v1100 = vrot.slane %v1038, %v1099
    %v1101 = vsel %vm1081, %v1100, 0.0
    %v1102 = vsel %vm1082, %v1100, 0.0
    %v1103 = vsel %vm1083, %v1100, 0.0
    %v1104 = vsel %vm1084, %v1100, 0.0
    %v1105 = vsel %vm1085, %v1100, 0.0
    %v1106 = vsel %vm1086, %v1100, 0.0
    %v1107 = vsel %vm1087, %v1100, 0.0
    %v1108 = vsel %vm1088, %v1100, 0.0
    %v1109 = vsel %vm1089, %v1100, 0.0
    %v1110 = vsel %vm1090, %v1100, 0.0
    %v1111 = vsel %vm1091, %v1100, 0.0
    %v1112 = vsel %vm1092, %v1100, 0.0
    %v1113 = vsel %vm1093, %v1100, 0.0
    %v1114 = vsel %vm1094, %v1100, 0.0
    %v1115 = vsel %vm1095, %v1100, 0.0
    %v1116 = vsel %vm1096, %v1100, 0.0
    %v1117 = vsel %vm158, %v1101, 0.0
    %1118 = vadd.xlane.f32.xlu0 %v1117
    %v1119 = vpop.xlane.xlu0 %1118
    %v1120 = vsel %vm158, %v1102, 0.0
    %1121 = vadd.xlane.f32.xlu0 %v1120
    %v1122 = vpop.xlane.xlu0 %1121
    %v1123 = vsel %vm158, %v1103, 0.0
    %1124 = vadd.xlane.f32.xlu0 %v1123
    %v1125 = vpop.xlane.xlu0 %1124
    %v1126 = vsel %vm158, %v1104, 0.0
    %1127 = vadd.xlane.f32.xlu0 %v1126
    %v1128 = vpop.xlane.xlu0 %1127
    %v1129 = vsel %vm158, %v1105, 0.0
    %1130 = vadd.xlane.f32.xlu0 %v1129
    %v1131 = vpop.xlane.xlu0 %1130
    %v1132 = vsel %vm158, %v1106, 0.0
    %1133 = vadd.xlane.f32.xlu0 %v1132
    %v1134 = vpop.xlane.xlu0 %1133
    %v1135 = vsel %vm158, %v1107, 0.0
    %1136 = vadd.xlane.f32.xlu0 %v1135
    %v1137 = vpop.xlane.xlu0 %1136
    %v1138 = vsel %vm158, %v1108, 0.0
    %1139 = vadd.xlane.f32.xlu0 %v1138
    %v1140 = vpop.xlane.xlu0 %1139
    %v1141 = vsel %vm158, %v1109, 0.0
    %1142 = vadd.xlane.f32.xlu0 %v1141
    %v1143 = vpop.xlane.xlu0 %1142
    %v1144 = vsel %vm158, %v1110, 0.0
    %1145 = vadd.xlane.f32.xlu0 %v1144
    %v1146 = vpop.xlane.xlu0 %1145
    %v1147 = vsel %vm158, %v1111, 0.0
    %1148 = vadd.xlane.f32.xlu0 %v1147
    %v1149 = vpop.xlane.xlu0 %1148
    %v1150 = vsel %vm158, %v1112, 0.0
    %1151 = vadd.xlane.f32.xlu0 %v1150
    %v1152 = vpop.xlane.xlu0 %1151
    %v1153 = vsel %vm158, %v1113, 0.0
    %1154 = vadd.xlane.f32.xlu0 %v1153
    %v1155 = vpop.xlane.xlu0 %1154
    %v1156 = vsel %vm158, %v1114, 0.0
    %1157 = vadd.xlane.f32.xlu0 %v1156
    %v1158 = vpop.xlane.xlu0 %1157
    %v1159 = vsel %vm158, %v1115, 0.0
    %1160 = vadd.xlane.f32.xlu0 %v1159
    %v1161 = vpop.xlane.xlu0 %1160
    %v1162 = vsel %vm158, %v1116, 0.0
    %1163 = vadd.xlane.f32.xlu0 %v1162
    %v1164 = vpop.xlane.xlu0 %1163
    %s1165 = sadd.s32 %s207, 4
    %s1166 = sld [smem:[#allocation3 + %s1165]]
    %v1167 = vstv %s1166
    %vm1168 = vcmp.le.s32.totalorder %v61, %v1167
    %vm1169 = vcmp.le.s32.totalorder %v62, %v1167
    %vm1170 = vcmp.le.s32.totalorder %v63, %v1167
    %vm1171 = vcmp.le.s32.totalorder %v64, %v1167
    %vm1172 = vcmp.le.s32.totalorder %v65, %v1167
    %vm1173 = vcmp.le.s32.totalorder %v66, %v1167
    %vm1174 = vcmp.le.s32.totalorder %v67, %v1167
    %vm1175 = vcmp.le.s32.totalorder %v68, %v1167
    %vm1176 = vcmp.le.s32.totalorder %v69, %v1167
    %vm1177 = vcmp.le.s32.totalorder %v70, %v1167
    %vm1178 = vcmp.le.s32.totalorder %v71, %v1167
    %vm1179 = vcmp.le.s32.totalorder %v72, %v1167
    %vm1180 = vcmp.le.s32.totalorder %v73, %v1167
    %vm1181 = vcmp.le.s32.totalorder %v74, %v1167
    %vm1182 = vcmp.le.s32.totalorder %v75, %v1167
    %vm1183 = vcmp.le.s32.totalorder %v76, %v1167
    %v1184 = vsub.f32 %v1119, 1.0
    %v1185 = vsub.f32 %v1122, 1.0
    %v1186 = vsub.f32 %v1125, 1.0
    %v1187 = vsub.f32 %v1128, 1.0
    %v1188 = vsub.f32 %v1131, 1.0
    %v1189 = vsub.f32 %v1134, 1.0
    %v1190 = vsub.f32 %v1137, 1.0
    %v1191 = vsub.f32 %v1140, 1.0
    %v1192 = vsub.f32 %v1143, 1.0
    %v1193 = vsub.f32 %v1146, 1.0
    %v1194 = vsub.f32 %v1149, 1.0
    %v1195 = vsub.f32 %v1152, 1.0
    %v1196 = vsub.f32 %v1155, 1.0
    %v1197 = vsub.f32 %v1158, 1.0
    %v1198 = vsub.f32 %v1161, 1.0
    %v1199 = vsub.f32 %v1164, 1.0
    %v1200 = vand.u32 2147483647, %v1184
    %v1201 = vand.u32 2147483647, %v1185
    %v1202 = vand.u32 2147483647, %v1186
    %v1203 = vand.u32 2147483647, %v1187
    %v1204 = vand.u32 2147483647, %v1188
    %v1205 = vand.u32 2147483647, %v1189
    %v1206 = vand.u32 2147483647, %v1190
    %v1207 = vand.u32 2147483647, %v1191
    %v1208 = vand.u32 2147483647, %v1192
    %v1209 = vand.u32 2147483647, %v1193
    %v1210 = vand.u32 2147483647, %v1194
    %v1211 = vand.u32 2147483647, %v1195
    %v1212 = vand.u32 2147483647, %v1196
    %v1213 = vand.u32 2147483647, %v1197
    %v1214 = vand.u32 2147483647, %v1198
    %v1215 = vand.u32 2147483647, %v1199
    %v1216 = vsel %vm1168, %v1200, 0.0
    %v1217 = vsel %vm1169, %v1201, 0.0
    %v1218 = vsel %vm1170, %v1202, 0.0
    %v1219 = vsel %vm1171, %v1203, 0.0
    %v1220 = vsel %vm1172, %v1204, 0.0
    %v1221 = vsel %vm1173, %v1205, 0.0
    %v1222 = vsel %vm1174, %v1206, 0.0
    %v1223 = vsel %vm1175, %v1207, 0.0
    %v1224 = vsel %vm1176, %v1208, 0.0
    %v1225 = vsel %vm1177, %v1209, 0.0
    %v1226 = vsel %vm1178, %v1210, 0.0
    %v1227 = vsel %vm1179, %v1211, 0.0
    %v1228 = vsel %vm1180, %v1212, 0.0
    %v1229 = vsel %vm1181, %v1213, 0.0
    %v1230 = vsel %vm1182, %v1214, 0.0
    %v1231 = vsel %vm1183, %v1215, 0.0
    %v1232 = vsel %vm274, %v1216, 0.0
    %v1233 = vsel %vm274, %v1217, 0.0
    %v1234 = vadd.f32 %v1232, %v1233
    %v1235 = vsel %vm274, %v1218, 0.0
    %v1236 = vadd.f32 %v1234, %v1235
    %v1237 = vsel %vm274, %v1219, 0.0
    %v1238 = vadd.f32 %v1236, %v1237
    %v1239 = vsel %vm274, %v1220, 0.0
    %v1240 = vadd.f32 %v1238, %v1239
    %v1241 = vsel %vm274, %v1221, 0.0
    %v1242 = vadd.f32 %v1240, %v1241
    %v1243 = vsel %vm274, %v1222, 0.0
    %v1244 = vadd.f32 %v1242, %v1243
    %v1245 = vsel %vm274, %v1223, 0.0
    %v1246 = vadd.f32 %v1244, %v1245
    %v1247 = vsel %vm274, %v1224, 0.0
    %v1248 = vadd.f32 %v1246, %v1247
    %v1249 = vsel %vm274, %v1225, 0.0
    %v1250 = vadd.f32 %v1248, %v1249
    %v1251 = vsel %vm274, %v1226, 0.0
    %v1252 = vadd.f32 %v1250, %v1251
    %v1253 = vsel %vm274, %v1227, 0.0
    %v1254 = vadd.f32 %v1252, %v1253
    %v1255 = vsel %vm274, %v1228, 0.0
    %v1256 = vadd.f32 %v1254, %v1255
    %v1257 = vsel %vm274, %v1229, 0.0
    %v1258 = vadd.f32 %v1256, %v1257
    %v1259 = vsel %vm274, %v1230, 0.0
    %v1260 = vadd.f32 %v1258, %v1259
    %v1261 = vsel %vm274, %v1231, 0.0
    %v1262 = vadd.f32 %v1260, %v1261
    %1263 = vadd.xlane.f32.xlu0 %v1262
    %v1264 = vpop.xlane.xlu0 %1263
    %v1265 = vrot.slane %v1264, 4
    %v1266 = vadd.f32 %v1264, %v1265
    %v1267 = vrot.slane %v1266, 2
    %v1268 = vadd.f32 %v1266, %v1267
    %v1269 = vrot.slane %v1268, 1
    %v1270 = vadd.f32 %v1268, %v1269
    %s1271 = vtos %v1270
    %vm1272 = vcmp.eq.s32.totalorder %v45, 4
    %vm1273 = vmand %vm1272, %vm316
    %v1274 = vstv %s1271
    %v1275 = vsel %vm1273, %v1274, 0.0
    %v1276 = vadd.f32 %v1037, %v1275
    %v1277 = vld [vmem:[#allocation4 + $0x5] sm:$0x1]
    %v1278 = vld [vmem:[#allocation7 + $0x5] sm:$0x1]
    %v1279 = vld [vmem:[%s3 + $0x5] sm:$0x1]
    %v1280 = vlaneseq
    %v1281 = vshrl.u32 %v1280, 7
    %v1282 = vsub.s32 0, %v1281
    %v1283 = vrot.slane %v1278, %v1282
    %vm1284 = vcmp.ge.s32.totalorder %v1283, %v61
    %vm1285 = vcmp.ge.s32.totalorder %v1283, %v62
    %vm1286 = vcmp.ge.s32.totalorder %v1283, %v63
    %vm1287 = vcmp.ge.s32.totalorder %v1283, %v64
    %vm1288 = vcmp.ge.s32.totalorder %v1283, %v65
    %vm1289 = vcmp.ge.s32.totalorder %v1283, %v66
    %vm1290 = vcmp.ge.s32.totalorder %v1283, %v67
    %vm1291 = vcmp.ge.s32.totalorder %v1283, %v68
    %vm1292 = vcmp.ge.s32.totalorder %v1283, %v69
    %vm1293 = vcmp.ge.s32.totalorder %v1283, %v70
    %vm1294 = vcmp.ge.s32.totalorder %v1283, %v71
    %vm1295 = vcmp.ge.s32.totalorder %v1283, %v72
    %vm1296 = vcmp.ge.s32.totalorder %v1283, %v73
    %vm1297 = vcmp.ge.s32.totalorder %v1283, %v74
    %vm1298 = vcmp.ge.s32.totalorder %v1283, %v75
    %vm1299 = vcmp.ge.s32.totalorder %v1283, %v76
    %v1300 = vlaneseq
    %v1301 = vshrl.u32 %v1300, 7
    %v1302 = vsub.s32 0, %v1301
    %v1303 = vrot.slane %v1279, %v1302
    %vm1304 = vcmp.le.s32.totalorder %v1303, %v61
    %vm1305 = vcmp.le.s32.totalorder %v1303, %v62
    %vm1306 = vcmp.le.s32.totalorder %v1303, %v63
    %vm1307 = vcmp.le.s32.totalorder %v1303, %v64
    %vm1308 = vcmp.le.s32.totalorder %v1303, %v65
    %vm1309 = vcmp.le.s32.totalorder %v1303, %v66
    %vm1310 = vcmp.le.s32.totalorder %v1303, %v67
    %vm1311 = vcmp.le.s32.totalorder %v1303, %v68
    %vm1312 = vcmp.le.s32.totalorder %v1303, %v69
    %vm1313 = vcmp.le.s32.totalorder %v1303, %v70
    %vm1314 = vcmp.le.s32.totalorder %v1303, %v71
    %vm1315 = vcmp.le.s32.totalorder %v1303, %v72
    %vm1316 = vcmp.le.s32.totalorder %v1303, %v73
    %vm1317 = vcmp.le.s32.totalorder %v1303, %v74
    %vm1318 = vcmp.le.s32.totalorder %v1303, %v75
    %vm1319 = vcmp.le.s32.totalorder %v1303, %v76
    %vm1320 = vmand %vm1284, %vm1304
    %vm1321 = vmand %vm1285, %vm1305
    %vm1322 = vmand %vm1286, %vm1306
    %vm1323 = vmand %vm1287, %vm1307
    %vm1324 = vmand %vm1288, %vm1308
    %vm1325 = vmand %vm1289, %vm1309
    %vm1326 = vmand %vm1290, %vm1310
    %vm1327 = vmand %vm1291, %vm1311
    %vm1328 = vmand %vm1292, %vm1312
    %vm1329 = vmand %vm1293, %vm1313
    %vm1330 = vmand %vm1294, %vm1314
    %vm1331 = vmand %vm1295, %vm1315
    %vm1332 = vmand %vm1296, %vm1316
    %vm1333 = vmand %vm1297, %vm1317
    %vm1334 = vmand %vm1298, %vm1318
    %vm1335 = vmand %vm1299, %vm1319
    %v1336 = vlaneseq
    %v1337 = vshrl.u32 %v1336, 7
    %v1338 = vsub.s32 0, %v1337
    %v1339 = vrot.slane %v1277, %v1338
    %v1340 = vsel %vm1320, %v1339, 0.0
    %v1341 = vsel %vm1321, %v1339, 0.0
    %v1342 = vsel %vm1322, %v1339, 0.0
    %v1343 = vsel %vm1323, %v1339, 0.0
    %v1344 = vsel %vm1324, %v1339, 0.0
    %v1345 = vsel %vm1325, %v1339, 0.0
    %v1346 = vsel %vm1326, %v1339, 0.0
    %v1347 = vsel %vm1327, %v1339, 0.0
    %v1348 = vsel %vm1328, %v1339, 0.0
    %v1349 = vsel %vm1329, %v1339, 0.0
    %v1350 = vsel %vm1330, %v1339, 0.0
    %v1351 = vsel %vm1331, %v1339, 0.0
    %v1352 = vsel %vm1332, %v1339, 0.0
    %v1353 = vsel %vm1333, %v1339, 0.0
    %v1354 = vsel %vm1334, %v1339, 0.0
    %v1355 = vsel %vm1335, %v1339, 0.0
    %v1356 = vsel %vm158, %v1340, 0.0
    %1357 = vadd.xlane.f32.xlu0 %v1356
    %v1358 = vpop.xlane.xlu0 %1357
    %v1359 = vsel %vm158, %v1341, 0.0
    %1360 = vadd.xlane.f32.xlu0 %v1359
    %v1361 = vpop.xlane.xlu0 %1360
    %v1362 = vsel %vm158, %v1342, 0.0
    %1363 = vadd.xlane.f32.xlu0 %v1362
    %v1364 = vpop.xlane.xlu0 %1363
    %v1365 = vsel %vm158, %v1343, 0.0
    %1366 = vadd.xlane.f32.xlu0 %v1365
    %v1367 = vpop.xlane.xlu0 %1366
    %v1368 = vsel %vm158, %v1344, 0.0
    %1369 = vadd.xlane.f32.xlu0 %v1368
    %v1370 = vpop.xlane.xlu0 %1369
    %v1371 = vsel %vm158, %v1345, 0.0
    %1372 = vadd.xlane.f32.xlu0 %v1371
    %v1373 = vpop.xlane.xlu0 %1372
    %v1374 = vsel %vm158, %v1346, 0.0
    %1375 = vadd.xlane.f32.xlu0 %v1374
    %v1376 = vpop.xlane.xlu0 %1375
    %v1377 = vsel %vm158, %v1347, 0.0
    %1378 = vadd.xlane.f32.xlu0 %v1377
    %v1379 = vpop.xlane.xlu0 %1378
    %v1380 = vsel %vm158, %v1348, 0.0
    %1381 = vadd.xlane.f32.xlu0 %v1380
    %v1382 = vpop.xlane.xlu0 %1381
    %v1383 = vsel %vm158, %v1349, 0.0
    %1384 = vadd.xlane.f32.xlu0 %v1383
    %v1385 = vpop.xlane.xlu0 %1384
    %v1386 = vsel %vm158, %v1350, 0.0
    %1387 = vadd.xlane.f32.xlu0 %v1386
    %v1388 = vpop.xlane.xlu0 %1387
    %v1389 = vsel %vm158, %v1351, 0.0
    %1390 = vadd.xlane.f32.xlu0 %v1389
    %v1391 = vpop.xlane.xlu0 %1390
    %v1392 = vsel %vm158, %v1352, 0.0
    %1393 = vadd.xlane.f32.xlu0 %v1392
    %v1394 = vpop.xlane.xlu0 %1393
    %v1395 = vsel %vm158, %v1353, 0.0
    %1396 = vadd.xlane.f32.xlu0 %v1395
    %v1397 = vpop.xlane.xlu0 %1396
    %v1398 = vsel %vm158, %v1354, 0.0
    %1399 = vadd.xlane.f32.xlu0 %v1398
    %v1400 = vpop.xlane.xlu0 %1399
    %v1401 = vsel %vm158, %v1355, 0.0
    %1402 = vadd.xlane.f32.xlu0 %v1401
    %v1403 = vpop.xlane.xlu0 %1402
    %s1404 = sadd.s32 %s207, 5
    %s1405 = sld [smem:[#allocation3 + %s1404]]
    %v1406 = vstv %s1405
    %vm1407 = vcmp.le.s32.totalorder %v61, %v1406
    %vm1408 = vcmp.le.s32.totalorder %v62, %v1406
    %vm1409 = vcmp.le.s32.totalorder %v63, %v1406
    %vm1410 = vcmp.le.s32.totalorder %v64, %v1406
    %vm1411 = vcmp.le.s32.totalorder %v65, %v1406
    %vm1412 = vcmp.le.s32.totalorder %v66, %v1406
    %vm1413 = vcmp.le.s32.totalorder %v67, %v1406
    %vm1414 = vcmp.le.s32.totalorder %v68, %v1406
    %vm1415 = vcmp.le.s32.totalorder %v69, %v1406
    %vm1416 = vcmp.le.s32.totalorder %v70, %v1406
    %vm1417 = vcmp.le.s32.totalorder %v71, %v1406
    %vm1418 = vcmp.le.s32.totalorder %v72, %v1406
    %vm1419 = vcmp.le.s32.totalorder %v73, %v1406
    %vm1420 = vcmp.le.s32.totalorder %v74, %v1406
    %vm1421 = vcmp.le.s32.totalorder %v75, %v1406
    %vm1422 = vcmp.le.s32.totalorder %v76, %v1406
    %v1423 = vsub.f32 %v1358, 1.0
    %v1424 = vsub.f32 %v1361, 1.0
    %v1425 = vsub.f32 %v1364, 1.0
    %v1426 = vsub.f32 %v1367, 1.0
    %v1427 = vsub.f32 %v1370, 1.0
    %v1428 = vsub.f32 %v1373, 1.0
    %v1429 = vsub.f32 %v1376, 1.0
    %v1430 = vsub.f32 %v1379, 1.0
    %v1431 = vsub.f32 %v1382, 1.0
    %v1432 = vsub.f32 %v1385, 1.0
    %v1433 = vsub.f32 %v1388, 1.0
    %v1434 = vsub.f32 %v1391, 1.0
    %v1435 = vsub.f32 %v1394, 1.0
    %v1436 = vsub.f32 %v1397, 1.0
    %v1437 = vsub.f32 %v1400, 1.0
    %v1438 = vsub.f32 %v1403, 1.0
    %v1439 = vand.u32 2147483647, %v1423
    %v1440 = vand.u32 2147483647, %v1424
    %v1441 = vand.u32 2147483647, %v1425
    %v1442 = vand.u32 2147483647, %v1426
    %v1443 = vand.u32 2147483647, %v1427
    %v1444 = vand.u32 2147483647, %v1428
    %v1445 = vand.u32 2147483647, %v1429
    %v1446 = vand.u32 2147483647, %v1430
    %v1447 = vand.u32 2147483647, %v1431
    %v1448 = vand.u32 2147483647, %v1432
    %v1449 = vand.u32 2147483647, %v1433
    %v1450 = vand.u32 2147483647, %v1434
    %v1451 = vand.u32 2147483647, %v1435
    %v1452 = vand.u32 2147483647, %v1436
    %v1453 = vand.u32 2147483647, %v1437
    %v1454 = vand.u32 2147483647, %v1438
    %v1455 = vsel %vm1407, %v1439, 0.0
    %v1456 = vsel %vm1408, %v1440, 0.0
    %v1457 = vsel %vm1409, %v1441, 0.0
    %v1458 = vsel %vm1410, %v1442, 0.0
    %v1459 = vsel %vm1411, %v1443, 0.0
    %v1460 = vsel %vm1412, %v1444, 0.0
    %v1461 = vsel %vm1413, %v1445, 0.0
    %v1462 = vsel %vm1414, %v1446, 0.0
    %v1463 = vsel %vm1415, %v1447, 0.0
    %v1464 = vsel %vm1416, %v1448, 0.0
    %v1465 = vsel %vm1417, %v1449, 0.0
    %v1466 = vsel %vm1418, %v1450, 0.0
    %v1467 = vsel %vm1419, %v1451, 0.0
    %v1468 = vsel %vm1420, %v1452, 0.0
    %v1469 = vsel %vm1421, %v1453, 0.0
    %v1470 = vsel %vm1422, %v1454, 0.0
    %v1471 = vsel %vm274, %v1455, 0.0
    %v1472 = vsel %vm274, %v1456, 0.0
    %v1473 = vadd.f32 %v1471, %v1472
    %v1474 = vsel %vm274, %v1457, 0.0
    %v1475 = vadd.f32 %v1473, %v1474
    %v1476 = vsel %vm274, %v1458, 0.0
    %v1477 = vadd.f32 %v1475, %v1476
    %v1478 = vsel %vm274, %v1459, 0.0
    %v1479 = vadd.f32 %v1477, %v1478
    %v1480 = vsel %vm274, %v1460, 0.0
    %v1481 = vadd.f32 %v1479, %v1480
    %v1482 = vsel %vm274, %v1461, 0.0
    %v1483 = vadd.f32 %v1481, %v1482
    %v1484 = vsel %vm274, %v1462, 0.0
    %v1485 = vadd.f32 %v1483, %v1484
    %v1486 = vsel %vm274, %v1463, 0.0
    %v1487 = vadd.f32 %v1485, %v1486
    %v1488 = vsel %vm274, %v1464, 0.0
    %v1489 = vadd.f32 %v1487, %v1488
    %v1490 = vsel %vm274, %v1465, 0.0
    %v1491 = vadd.f32 %v1489, %v1490
    %v1492 = vsel %vm274, %v1466, 0.0
    %v1493 = vadd.f32 %v1491, %v1492
    %v1494 = vsel %vm274, %v1467, 0.0
    %v1495 = vadd.f32 %v1493, %v1494
    %v1496 = vsel %vm274, %v1468, 0.0
    %v1497 = vadd.f32 %v1495, %v1496
    %v1498 = vsel %vm274, %v1469, 0.0
    %v1499 = vadd.f32 %v1497, %v1498
    %v1500 = vsel %vm274, %v1470, 0.0
    %v1501 = vadd.f32 %v1499, %v1500
    %1502 = vadd.xlane.f32.xlu0 %v1501
    %v1503 = vpop.xlane.xlu0 %1502
    %v1504 = vrot.slane %v1503, 4
    %v1505 = vadd.f32 %v1503, %v1504
    %v1506 = vrot.slane %v1505, 2
    %v1507 = vadd.f32 %v1505, %v1506
    %v1508 = vrot.slane %v1507, 1
    %v1509 = vadd.f32 %v1507, %v1508
    %s1510 = vtos %v1509
    %vm1511 = vcmp.eq.s32.totalorder %v45, 5
    %vm1512 = vmand %vm1511, %vm316
    %v1513 = vstv %s1510
    %v1514 = vsel %vm1512, %v1513, 0.0
    %v1515 = vadd.f32 %v1276, %v1514
    %v1516 = vld [vmem:[#allocation4 + $0x6] sm:$0x1]
    %v1517 = vld [vmem:[#allocation7 + $0x6] sm:$0x1]
    %v1518 = vld [vmem:[%s3 + $0x6] sm:$0x1]
    %v1519 = vlaneseq
    %v1520 = vshrl.u32 %v1519, 7
    %v1521 = vsub.s32 0, %v1520
    %v1522 = vrot.slane %v1517, %v1521
    %vm1523 = vcmp.ge.s32.totalorder %v1522, %v61
    %vm1524 = vcmp.ge.s32.totalorder %v1522, %v62
    %vm1525 = vcmp.ge.s32.totalorder %v1522, %v63
    %vm1526 = vcmp.ge.s32.totalorder %v1522, %v64
    %vm1527 = vcmp.ge.s32.totalorder %v1522, %v65
    %vm1528 = vcmp.ge.s32.totalorder %v1522, %v66
    %vm1529 = vcmp.ge.s32.totalorder %v1522, %v67
    %vm1530 = vcmp.ge.s32.totalorder %v1522, %v68
    %vm1531 = vcmp.ge.s32.totalorder %v1522, %v69
    %vm1532 = vcmp.ge.s32.totalorder %v1522, %v70
    %vm1533 = vcmp.ge.s32.totalorder %v1522, %v71
    %vm1534 = vcmp.ge.s32.totalorder %v1522, %v72
    %vm1535 = vcmp.ge.s32.totalorder %v1522, %v73
    %vm1536 = vcmp.ge.s32.totalorder %v1522, %v74
    %vm1537 = vcmp.ge.s32.totalorder %v1522, %v75
    %vm1538 = vcmp.ge.s32.totalorder %v1522, %v76
    %v1539 = vlaneseq
    %v1540 = vshrl.u32 %v1539, 7
    %v1541 = vsub.s32 0, %v1540
    %v1542 = vrot.slane %v1518, %v1541
    %vm1543 = vcmp.le.s32.totalorder %v1542, %v61
    %vm1544 = vcmp.le.s32.totalorder %v1542, %v62
    %vm1545 = vcmp.le.s32.totalorder %v1542, %v63
    %vm1546 = vcmp.le.s32.totalorder %v1542, %v64
    %vm1547 = vcmp.le.s32.totalorder %v1542, %v65
    %vm1548 = vcmp.le.s32.totalorder %v1542, %v66
    %vm1549 = vcmp.le.s32.totalorder %v1542, %v67
    %vm1550 = vcmp.le.s32.totalorder %v1542, %v68
    %vm1551 = vcmp.le.s32.totalorder %v1542, %v69
    %vm1552 = vcmp.le.s32.totalorder %v1542, %v70
    %vm1553 = vcmp.le.s32.totalorder %v1542, %v71
    %vm1554 = vcmp.le.s32.totalorder %v1542, %v72
    %vm1555 = vcmp.le.s32.totalorder %v1542, %v73
    %vm1556 = vcmp.le.s32.totalorder %v1542, %v74
    %vm1557 = vcmp.le.s32.totalorder %v1542, %v75
    %vm1558 = vcmp.le.s32.totalorder %v1542, %v76
    %vm1559 = vmand %vm1523, %vm1543
    %vm1560 = vmand %vm1524, %vm1544
    %vm1561 = vmand %vm1525, %vm1545
    %vm1562 = vmand %vm1526, %vm1546
    %vm1563 = vmand %vm1527, %vm1547
    %vm1564 = vmand %vm1528, %vm1548
    %vm1565 = vmand %vm1529, %vm1549
    %vm1566 = vmand %vm1530, %vm1550
    %vm1567 = vmand %vm1531, %vm1551
    %vm1568 = vmand %vm1532, %vm1552
    %vm1569 = vmand %vm1533, %vm1553
    %vm1570 = vmand %vm1534, %vm1554
    %vm1571 = vmand %vm1535, %vm1555
    %vm1572 = vmand %vm1536, %vm1556
    %vm1573 = vmand %vm1537, %vm1557
    %vm1574 = vmand %vm1538, %vm1558
    %v1575 = vlaneseq
    %v1576 = vshrl.u32 %v1575, 7
    %v1577 = vsub.s32 0, %v1576
    %v1578 = vrot.slane %v1516, %v1577
    %v1579 = vsel %vm1559, %v1578, 0.0
    %v1580 = vsel %vm1560, %v1578, 0.0
    %v1581 = vsel %vm1561, %v1578, 0.0
    %v1582 = vsel %vm1562, %v1578, 0.0
    %v1583 = vsel %vm1563, %v1578, 0.0
    %v1584 = vsel %vm1564, %v1578, 0.0
    %v1585 = vsel %vm1565, %v1578, 0.0
    %v1586 = vsel %vm1566, %v1578, 0.0
    %v1587 = vsel %vm1567, %v1578, 0.0
    %v1588 = vsel %vm1568, %v1578, 0.0
    %v1589 = vsel %vm1569, %v1578, 0.0
    %v1590 = vsel %vm1570, %v1578, 0.0
    %v1591 = vsel %vm1571, %v1578, 0.0
    %v1592 = vsel %vm1572, %v1578, 0.0
    %v1593 = vsel %vm1573, %v1578, 0.0
    %v1594 = vsel %vm1574, %v1578, 0.0
    %v1595 = vsel %vm158, %v1579, 0.0
    %1596 = vadd.xlane.f32.xlu0 %v1595
    %v1597 = vpop.xlane.xlu0 %1596
    %v1598 = vsel %vm158, %v1580, 0.0
    %1599 = vadd.xlane.f32.xlu0 %v1598
    %v1600 = vpop.xlane.xlu0 %1599
    %v1601 = vsel %vm158, %v1581, 0.0
    %1602 = vadd.xlane.f32.xlu0 %v1601
    %v1603 = vpop.xlane.xlu0 %1602
    %v1604 = vsel %vm158, %v1582, 0.0
    %1605 = vadd.xlane.f32.xlu0 %v1604
    %v1606 = vpop.xlane.xlu0 %1605
    %v1607 = vsel %vm158, %v1583, 0.0
    %1608 = vadd.xlane.f32.xlu0 %v1607
    %v1609 = vpop.xlane.xlu0 %1608
    %v1610 = vsel %vm158, %v1584, 0.0
    %1611 = vadd.xlane.f32.xlu0 %v1610
    %v1612 = vpop.xlane.xlu0 %1611
    %v1613 = vsel %vm158, %v1585, 0.0
    %1614 = vadd.xlane.f32.xlu0 %v1613
    %v1615 = vpop.xlane.xlu0 %1614
    %v1616 = vsel %vm158, %v1586, 0.0
    %1617 = vadd.xlane.f32.xlu0 %v1616
    %v1618 = vpop.xlane.xlu0 %1617
    %v1619 = vsel %vm158, %v1587, 0.0
    %1620 = vadd.xlane.f32.xlu0 %v1619
    %v1621 = vpop.xlane.xlu0 %1620
    %v1622 = vsel %vm158, %v1588, 0.0
    %1623 = vadd.xlane.f32.xlu0 %v1622
    %v1624 = vpop.xlane.xlu0 %1623
    %v1625 = vsel %vm158, %v1589, 0.0
    %1626 = vadd.xlane.f32.xlu0 %v1625
    %v1627 = vpop.xlane.xlu0 %1626
    %v1628 = vsel %vm158, %v1590, 0.0
    %1629 = vadd.xlane.f32.xlu0 %v1628
    %v1630 = vpop.xlane.xlu0 %1629
    %v1631 = vsel %vm158, %v1591, 0.0
    %1632 = vadd.xlane.f32.xlu0 %v1631
    %v1633 = vpop.xlane.xlu0 %1632
    %v1634 = vsel %vm158, %v1592, 0.0
    %1635 = vadd.xlane.f32.xlu0 %v1634
    %v1636 = vpop.xlane.xlu0 %1635
    %v1637 = vsel %vm158, %v1593, 0.0
    %1638 = vadd.xlane.f32.xlu0 %v1637
    %v1639 = vpop.xlane.xlu0 %1638
    %v1640 = vsel %vm158, %v1594, 0.0
    %1641 = vadd.xlane.f32.xlu0 %v1640
    %v1642 = vpop.xlane.xlu0 %1641
    %s1643 = sadd.s32 %s207, 6
    %s1644 = sld [smem:[#allocation3 + %s1643]]
    %v1645 = vstv %s1644
    %vm1646 = vcmp.le.s32.totalorder %v61, %v1645
    %vm1647 = vcmp.le.s32.totalorder %v62, %v1645
    %vm1648 = vcmp.le.s32.totalorder %v63, %v1645
    %vm1649 = vcmp.le.s32.totalorder %v64, %v1645
    %vm1650 = vcmp.le.s32.totalorder %v65, %v1645
    %vm1651 = vcmp.le.s32.totalorder %v66, %v1645
    %vm1652 = vcmp.le.s32.totalorder %v67, %v1645
    %vm1653 = vcmp.le.s32.totalorder %v68, %v1645
    %vm1654 = vcmp.le.s32.totalorder %v69, %v1645
    %vm1655 = vcmp.le.s32.totalorder %v70, %v1645
    %vm1656 = vcmp.le.s32.totalorder %v71, %v1645
    %vm1657 = vcmp.le.s32.totalorder %v72, %v1645
    %vm1658 = vcmp.le.s32.totalorder %v73, %v1645
    %vm1659 = vcmp.le.s32.totalorder %v74, %v1645
    %vm1660 = vcmp.le.s32.totalorder %v75, %v1645
    %vm1661 = vcmp.le.s32.totalorder %v76, %v1645
    %v1662 = vsub.f32 %v1597, 1.0
    %v1663 = vsub.f32 %v1600, 1.0
    %v1664 = vsub.f32 %v1603, 1.0
    %v1665 = vsub.f32 %v1606, 1.0
    %v1666 = vsub.f32 %v1609, 1.0
    %v1667 = vsub.f32 %v1612, 1.0
    %v1668 = vsub.f32 %v1615, 1.0
    %v1669 = vsub.f32 %v1618, 1.0
    %v1670 = vsub.f32 %v1621, 1.0
    %v1671 = vsub.f32 %v1624, 1.0
    %v1672 = vsub.f32 %v1627, 1.0
    %v1673 = vsub.f32 %v1630, 1.0
    %v1674 = vsub.f32 %v1633, 1.0
    %v1675 = vsub.f32 %v1636, 1.0
    %v1676 = vsub.f32 %v1639, 1.0
    %v1677 = vsub.f32 %v1642, 1.0
    %v1678 = vand.u32 2147483647, %v1662
    %v1679 = vand.u32 2147483647, %v1663
    %v1680 = vand.u32 2147483647, %v1664
    %v1681 = vand.u32 2147483647, %v1665
    %v1682 = vand.u32 2147483647, %v1666
    %v1683 = vand.u32 2147483647, %v1667
    %v1684 = vand.u32 2147483647, %v1668
    %v1685 = vand.u32 2147483647, %v1669
    %v1686 = vand.u32 2147483647, %v1670
    %v1687 = vand.u32 2147483647, %v1671
    %v1688 = vand.u32 2147483647, %v1672
    %v1689 = vand.u32 2147483647, %v1673
    %v1690 = vand.u32 2147483647, %v1674
    %v1691 = vand.u32 2147483647, %v1675
    %v1692 = vand.u32 2147483647, %v1676
    %v1693 = vand.u32 2147483647, %v1677
    %v1694 = vsel %vm1646, %v1678, 0.0
    %v1695 = vsel %vm1647, %v1679, 0.0
    %v1696 = vsel %vm1648, %v1680, 0.0
    %v1697 = vsel %vm1649, %v1681, 0.0
    %v1698 = vsel %vm1650, %v1682, 0.0
    %v1699 = vsel %vm1651, %v1683, 0.0
    %v1700 = vsel %vm1652, %v1684, 0.0
    %v1701 = vsel %vm1653, %v1685, 0.0
    %v1702 = vsel %vm1654, %v1686, 0.0
    %v1703 = vsel %vm1655, %v1687, 0.0
    %v1704 = vsel %vm1656, %v1688, 0.0
    %v1705 = vsel %vm1657, %v1689, 0.0
    %v1706 = vsel %vm1658, %v1690, 0.0
    %v1707 = vsel %vm1659, %v1691, 0.0
    %v1708 = vsel %vm1660, %v1692, 0.0
    %v1709 = vsel %vm1661, %v1693, 0.0
    %v1710 = vsel %vm274, %v1694, 0.0
    %v1711 = vsel %vm274, %v1695, 0.0
    %v1712 = vadd.f32 %v1710, %v1711
    %v1713 = vsel %vm274, %v1696, 0.0
    %v1714 = vadd.f32 %v1712, %v1713
    %v1715 = vsel %vm274, %v1697, 0.0
    %v1716 = vadd.f32 %v1714, %v1715
    %v1717 = vsel %vm274, %v1698, 0.0
    %v1718 = vadd.f32 %v1716, %v1717
    %v1719 = vsel %vm274, %v1699, 0.0
    %v1720 = vadd.f32 %v1718, %v1719
    %v1721 = vsel %vm274, %v1700, 0.0
    %v1722 = vadd.f32 %v1720, %v1721
    %v1723 = vsel %vm274, %v1701, 0.0
    %v1724 = vadd.f32 %v1722, %v1723
    %v1725 = vsel %vm274, %v1702, 0.0
    %v1726 = vadd.f32 %v1724, %v1725
    %v1727 = vsel %vm274, %v1703, 0.0
    %v1728 = vadd.f32 %v1726, %v1727
    %v1729 = vsel %vm274, %v1704, 0.0
    %v1730 = vadd.f32 %v1728, %v1729
    %v1731 = vsel %vm274, %v1705, 0.0
    %v1732 = vadd.f32 %v1730, %v1731
    %v1733 = vsel %vm274, %v1706, 0.0
    %v1734 = vadd.f32 %v1732, %v1733
    %v1735 = vsel %vm274, %v1707, 0.0
    %v1736 = vadd.f32 %v1734, %v1735
    %v1737 = vsel %vm274, %v1708, 0.0
    %v1738 = vadd.f32 %v1736, %v1737
    %v1739 = vsel %vm274, %v1709, 0.0
    %v1740 = vadd.f32 %v1738, %v1739
    %1741 = vadd.xlane.f32.xlu0 %v1740
    %v1742 = vpop.xlane.xlu0 %1741
    %v1743 = vrot.slane %v1742, 4
    %v1744 = vadd.f32 %v1742, %v1743
    %v1745 = vrot.slane %v1744, 2
    %v1746 = vadd.f32 %v1744, %v1745
    %v1747 = vrot.slane %v1746, 1
    %v1748 = vadd.f32 %v1746, %v1747
    %s1749 = vtos %v1748
    %vm1750 = vcmp.eq.s32.totalorder %v45, 6
    %vm1751 = vmand %vm1750, %vm316
    %v1752 = vstv %s1749
    %v1753 = vsel %vm1751, %v1752, 0.0
    %v1754 = vadd.f32 %v1515, %v1753
    %v1755 = vld [vmem:[#allocation4 + $0x7] sm:$0x1]
    %v1756 = vld [vmem:[#allocation7 + $0x7] sm:$0x1]
    %v1757 = vld [vmem:[%s3 + $0x7] sm:$0x1]
    %v1758 = vlaneseq
    %v1759 = vshrl.u32 %v1758, 7
    %v1760 = vsub.s32 0, %v1759
    %v1761 = vrot.slane %v1756, %v1760
    %vm1762 = vcmp.ge.s32.totalorder %v1761, %v61
    %vm1763 = vcmp.ge.s32.totalorder %v1761, %v62
    %vm1764 = vcmp.ge.s32.totalorder %v1761, %v63
    %vm1765 = vcmp.ge.s32.totalorder %v1761, %v64
    %vm1766 = vcmp.ge.s32.totalorder %v1761, %v65
    %vm1767 = vcmp.ge.s32.totalorder %v1761, %v66
    %vm1768 = vcmp.ge.s32.totalorder %v1761, %v67
    %vm1769 = vcmp.ge.s32.totalorder %v1761, %v68
    %vm1770 = vcmp.ge.s32.totalorder %v1761, %v69
    %vm1771 = vcmp.ge.s32.totalorder %v1761, %v70
    %vm1772 = vcmp.ge.s32.totalorder %v1761, %v71
    %vm1773 = vcmp.ge.s32.totalorder %v1761, %v72
    %vm1774 = vcmp.ge.s32.totalorder %v1761, %v73
    %vm1775 = vcmp.ge.s32.totalorder %v1761, %v74
    %vm1776 = vcmp.ge.s32.totalorder %v1761, %v75
    %vm1777 = vcmp.ge.s32.totalorder %v1761, %v76
    %v1778 = vlaneseq
    %v1779 = vshrl.u32 %v1778, 7
    %v1780 = vsub.s32 0, %v1779
    %v1781 = vrot.slane %v1757, %v1780
    %vm1782 = vcmp.le.s32.totalorder %v1781, %v61
    %vm1783 = vcmp.le.s32.totalorder %v1781, %v62
    %vm1784 = vcmp.le.s32.totalorder %v1781, %v63
    %vm1785 = vcmp.le.s32.totalorder %v1781, %v64
    %vm1786 = vcmp.le.s32.totalorder %v1781, %v65
    %vm1787 = vcmp.le.s32.totalorder %v1781, %v66
    %vm1788 = vcmp.le.s32.totalorder %v1781, %v67
    %vm1789 = vcmp.le.s32.totalorder %v1781, %v68
    %vm1790 = vcmp.le.s32.totalorder %v1781, %v69
    %vm1791 = vcmp.le.s32.totalorder %v1781, %v70
    %vm1792 = vcmp.le.s32.totalorder %v1781, %v71
    %vm1793 = vcmp.le.s32.totalorder %v1781, %v72
    %vm1794 = vcmp.le.s32.totalorder %v1781, %v73
    %vm1795 = vcmp.le.s32.totalorder %v1781, %v74
    %vm1796 = vcmp.le.s32.totalorder %v1781, %v75
    %vm1797 = vcmp.le.s32.totalorder %v1781, %v76
    %vm1798 = vmand %vm1762, %vm1782
    %vm1799 = vmand %vm1763, %vm1783
    %vm1800 = vmand %vm1764, %vm1784
    %vm1801 = vmand %vm1765, %vm1785
    %vm1802 = vmand %vm1766, %vm1786
    %vm1803 = vmand %vm1767, %vm1787
    %vm1804 = vmand %vm1768, %vm1788
    %vm1805 = vmand %vm1769, %vm1789
    %vm1806 = vmand %vm1770, %vm1790
    %vm1807 = vmand %vm1771, %vm1791
    %vm1808 = vmand %vm1772, %vm1792
    %vm1809 = vmand %vm1773, %vm1793
    %vm1810 = vmand %vm1774, %vm1794
    %vm1811 = vmand %vm1775, %vm1795
    %vm1812 = vmand %vm1776, %vm1796
    %vm1813 = vmand %vm1777, %vm1797
    %v1814 = vlaneseq
    %v1815 = vshrl.u32 %v1814, 7
    %v1816 = vsub.s32 0, %v1815
    %v1817 = vrot.slane %v1755, %v1816
    %v1818 = vsel %vm1798, %v1817, 0.0
    %v1819 = vsel %vm1799, %v1817, 0.0
    %v1820 = vsel %vm1800, %v1817, 0.0
    %v1821 = vsel %vm1801, %v1817, 0.0
    %v1822 = vsel %vm1802, %v1817, 0.0
    %v1823 = vsel %vm1803, %v1817, 0.0
    %v1824 = vsel %vm1804, %v1817, 0.0
    %v1825 = vsel %vm1805, %v1817, 0.0
    %v1826 = vsel %vm1806, %v1817, 0.0
    %v1827 = vsel %vm1807, %v1817, 0.0
    %v1828 = vsel %vm1808, %v1817, 0.0
    %v1829 = vsel %vm1809, %v1817, 0.0
    %v1830 = vsel %vm1810, %v1817, 0.0
    %v1831 = vsel %vm1811, %v1817, 0.0
    %v1832 = vsel %vm1812, %v1817, 0.0
    %v1833 = vsel %vm1813, %v1817, 0.0
    %v1834 = vsel %vm158, %v1818, 0.0
    %1835 = vadd.xlane.f32.xlu0 %v1834
    %v1836 = vpop.xlane.xlu0 %1835
    %v1837 = vsel %vm158, %v1819, 0.0
    %1838 = vadd.xlane.f32.xlu0 %v1837
    %v1839 = vpop.xlane.xlu0 %1838
    %v1840 = vsel %vm158, %v1820, 0.0
    %1841 = vadd.xlane.f32.xlu0 %v1840
    %v1842 = vpop.xlane.xlu0 %1841
    %v1843 = vsel %vm158, %v1821, 0.0
    %1844 = vadd.xlane.f32.xlu0 %v1843
    %v1845 = vpop.xlane.xlu0 %1844
    %v1846 = vsel %vm158, %v1822, 0.0
    %1847 = vadd.xlane.f32.xlu0 %v1846
    %v1848 = vpop.xlane.xlu0 %1847
    %v1849 = vsel %vm158, %v1823, 0.0
    %1850 = vadd.xlane.f32.xlu0 %v1849
    %v1851 = vpop.xlane.xlu0 %1850
    %v1852 = vsel %vm158, %v1824, 0.0
    %1853 = vadd.xlane.f32.xlu0 %v1852
    %v1854 = vpop.xlane.xlu0 %1853
    %v1855 = vsel %vm158, %v1825, 0.0
    %1856 = vadd.xlane.f32.xlu0 %v1855
    %v1857 = vpop.xlane.xlu0 %1856
    %v1858 = vsel %vm158, %v1826, 0.0
    %1859 = vadd.xlane.f32.xlu0 %v1858
    %v1860 = vpop.xlane.xlu0 %1859
    %v1861 = vsel %vm158, %v1827, 0.0
    %1862 = vadd.xlane.f32.xlu0 %v1861
    %v1863 = vpop.xlane.xlu0 %1862
    %v1864 = vsel %vm158, %v1828, 0.0
    %1865 = vadd.xlane.f32.xlu0 %v1864
    %v1866 = vpop.xlane.xlu0 %1865
    %v1867 = vsel %vm158, %v1829, 0.0
    %1868 = vadd.xlane.f32.xlu0 %v1867
    %v1869 = vpop.xlane.xlu0 %1868
    %v1870 = vsel %vm158, %v1830, 0.0
    %1871 = vadd.xlane.f32.xlu0 %v1870
    %v1872 = vpop.xlane.xlu0 %1871
    %v1873 = vsel %vm158, %v1831, 0.0
    %1874 = vadd.xlane.f32.xlu0 %v1873
    %v1875 = vpop.xlane.xlu0 %1874
    %v1876 = vsel %vm158, %v1832, 0.0
    %1877 = vadd.xlane.f32.xlu0 %v1876
    %v1878 = vpop.xlane.xlu0 %1877
    %v1879 = vsel %vm158, %v1833, 0.0
    %1880 = vadd.xlane.f32.xlu0 %v1879
    %v1881 = vpop.xlane.xlu0 %1880
    %s1882 = sadd.s32 %s207, 7
    %s1883 = sld [smem:[#allocation3 + %s1882]]
    %v1884 = vstv %s1883
    %vm1885 = vcmp.le.s32.totalorder %v61, %v1884
    %vm1886 = vcmp.le.s32.totalorder %v62, %v1884
    %vm1887 = vcmp.le.s32.totalorder %v63, %v1884
    %vm1888 = vcmp.le.s32.totalorder %v64, %v1884
    %vm1889 = vcmp.le.s32.totalorder %v65, %v1884
    %vm1890 = vcmp.le.s32.totalorder %v66, %v1884
    %vm1891 = vcmp.le.s32.totalorder %v67, %v1884
    %vm1892 = vcmp.le.s32.totalorder %v68, %v1884
    %vm1893 = vcmp.le.s32.totalorder %v69, %v1884
    %vm1894 = vcmp.le.s32.totalorder %v70, %v1884
    %vm1895 = vcmp.le.s32.totalorder %v71, %v1884
    %vm1896 = vcmp.le.s32.totalorder %v72, %v1884
    %vm1897 = vcmp.le.s32.totalorder %v73, %v1884
    %vm1898 = vcmp.le.s32.totalorder %v74, %v1884
    %vm1899 = vcmp.le.s32.totalorder %v75, %v1884
    %vm1900 = vcmp.le.s32.totalorder %v76, %v1884
    %v1901 = vsub.f32 %v1836, 1.0
    %v1902 = vsub.f32 %v1839, 1.0
    %v1903 = vsub.f32 %v1842, 1.0
    %v1904 = vsub.f32 %v1845, 1.0
    %v1905 = vsub.f32 %v1848, 1.0
    %v1906 = vsub.f32 %v1851, 1.0
    %v1907 = vsub.f32 %v1854, 1.0
    %v1908 = vsub.f32 %v1857, 1.0
    %v1909 = vsub.f32 %v1860, 1.0
    %v1910 = vsub.f32 %v1863, 1.0
    %v1911 = vsub.f32 %v1866, 1.0
    %v1912 = vsub.f32 %v1869, 1.0
    %v1913 = vsub.f32 %v1872, 1.0
    %v1914 = vsub.f32 %v1875, 1.0
    %v1915 = vsub.f32 %v1878, 1.0
    %v1916 = vsub.f32 %v1881, 1.0
    %v1917 = vand.u32 2147483647, %v1901
    %v1918 = vand.u32 2147483647, %v1902
    %v1919 = vand.u32 2147483647, %v1903
    %v1920 = vand.u32 2147483647, %v1904
    %v1921 = vand.u32 2147483647, %v1905
    %v1922 = vand.u32 2147483647, %v1906
    %v1923 = vand.u32 2147483647, %v1907
    %v1924 = vand.u32 2147483647, %v1908
    %v1925 = vand.u32 2147483647, %v1909
    %v1926 = vand.u32 2147483647, %v1910
    %v1927 = vand.u32 2147483647, %v1911
    %v1928 = vand.u32 2147483647, %v1912
    %v1929 = vand.u32 2147483647, %v1913
    %v1930 = vand.u32 2147483647, %v1914
    %v1931 = vand.u32 2147483647, %v1915
    %v1932 = vand.u32 2147483647, %v1916
    %v1933 = vsel %vm1885, %v1917, 0.0
    %v1934 = vsel %vm1886, %v1918, 0.0
    %v1935 = vsel %vm1887, %v1919, 0.0
    %v1936 = vsel %vm1888, %v1920, 0.0
    %v1937 = vsel %vm1889, %v1921, 0.0
    %v1938 = vsel %vm1890, %v1922, 0.0
    %v1939 = vsel %vm1891, %v1923, 0.0
    %v1940 = vsel %vm1892, %v1924, 0.0
    %v1941 = vsel %vm1893, %v1925, 0.0
    %v1942 = vsel %vm1894, %v1926, 0.0
    %v1943 = vsel %vm1895, %v1927, 0.0
    %v1944 = vsel %vm1896, %v1928, 0.0
    %v1945 = vsel %vm1897, %v1929, 0.0
    %v1946 = vsel %vm1898, %v1930, 0.0
    %v1947 = vsel %vm1899, %v1931, 0.0
    %v1948 = vsel %vm1900, %v1932, 0.0
    %v1949 = vsel %vm274, %v1933, 0.0
    %v1950 = vsel %vm274, %v1934, 0.0
    %v1951 = vadd.f32 %v1949, %v1950
    %v1952 = vsel %vm274, %v1935, 0.0
    %v1953 = vadd.f32 %v1951, %v1952
    %v1954 = vsel %vm274, %v1936, 0.0
    %v1955 = vadd.f32 %v1953, %v1954
    %v1956 = vsel %vm274, %v1937, 0.0
    %v1957 = vadd.f32 %v1955, %v1956
    %v1958 = vsel %vm274, %v1938, 0.0
    %v1959 = vadd.f32 %v1957, %v1958
    %v1960 = vsel %vm274, %v1939, 0.0
    %v1961 = vadd.f32 %v1959, %v1960
    %v1962 = vsel %vm274, %v1940, 0.0
    %v1963 = vadd.f32 %v1961, %v1962
    %v1964 = vsel %vm274, %v1941, 0.0
    %v1965 = vadd.f32 %v1963, %v1964
    %v1966 = vsel %vm274, %v1942, 0.0
    %v1967 = vadd.f32 %v1965, %v1966
    %v1968 = vsel %vm274, %v1943, 0.0
    %v1969 = vadd.f32 %v1967, %v1968
    %v1970 = vsel %vm274, %v1944, 0.0
    %v1971 = vadd.f32 %v1969, %v1970
    %v1972 = vsel %vm274, %v1945, 0.0
    %v1973 = vadd.f32 %v1971, %v1972
    %v1974 = vsel %vm274, %v1946, 0.0
    %v1975 = vadd.f32 %v1973, %v1974
    %v1976 = vsel %vm274, %v1947, 0.0
    %v1977 = vadd.f32 %v1975, %v1976
    %v1978 = vsel %vm274, %v1948, 0.0
    %v1979 = vadd.f32 %v1977, %v1978
    %1980 = vadd.xlane.f32.xlu0 %v1979
    %v1981 = vpop.xlane.xlu0 %1980
    %v1982 = vrot.slane %v1981, 4
    %v1983 = vadd.f32 %v1981, %v1982
    %v1984 = vrot.slane %v1983, 2
    %v1985 = vadd.f32 %v1983, %v1984
    %v1986 = vrot.slane %v1985, 1
    %v1987 = vadd.f32 %v1985, %v1986
    %s1988 = vtos %v1987
    %vm1989 = vcmp.eq.s32.totalorder %v45, 7
    %vm1990 = vmand %vm1989, %vm316
    %v1991 = vstv %s1988
    %v1992 = vsel %vm1990, %v1991, 0.0
    %v1993 = vadd.f32 %v1754, %v1992
    %1994 = vst [vmem:[#allocation9] sm:$0xff] %v1993
    // Predicated region
    $region22: #{tpu_custom_call.1} parent=1 // pred_check
      _
    $region23: #{tpu_custom_call.1} parent=1 // pred_check_branch
      %1996 = sbr.rel (0) target = $region25
    $region24: #{tpu_custom_call.1} parent=1 // pred_region
      %s1998 = ssub.s32 128, 128
      %1999 = vsyncadd [#allocation6], %s1998
      %s2001 = sshll.u32 [#allocation9], 4
      %s2002 = int_to_ptr.vmem [resolvable:$true] %s2001
      %2004 = dma.vmem_to_hbm [thread:$0]  %s2002, 128, %s4, [#allocation6]
    $region25: #{tpu_custom_call.1} parent=1 // pred_fallthru
      _
    // Predicated region
    $region26: #{tpu_custom_call.1} parent=1 // pred_check
      _
    $region27: #{tpu_custom_call.1} parent=1 // pred_check_branch
      %2006 = sbr.rel (0) target = $region29
    $region28: #{tpu_custom_call.1} parent=1 // pred_region
      %2007 = dma.done [#allocation6], 128
    $region29: #{tpu_custom_call.1} parent=1 // pred_fallthru
      _
    %2008 = vsyncpa [#allocation5], 1
    %2009 = vsyncpa [#allocation8], 1
    %2010 = vsyncpa [#allocation6], 1

</llo_original>
